<compile_context>
chip_gen: v7x
topology: tpu7x:2x2x1
jax: 0.10.0
libtpu: 0.0.40
codegen_flags: <defaults>
</compile_context>

<pallas_src>
import functools

import jax
import jax.numpy as jnp
from jax.experimental import pallas as pl
from jax.experimental.pallas import tpu as pltpu

DIM = 512
IN_FEATURES = 2
OUT_FEATURES = 2
OUT_PAD = 128          # lane-dense padded output width
IN_PAD_MXU = 128       # tile-aligned K for the MXU layer-1 path (v6e/v7x)


def _round_up(x, m):
    return (x + m - 1) // m * m


def _device_kind():
    try:
        return jax.devices()[0].device_kind.lower()
    except Exception:
        return ""


_KIND = _device_kind()
# v6e / v7x have a bf16-native VPU -> bf16 bias/ReLU epilogue + MXU layer 1.
_HAS_BF16_VPU = any(t in _KIND for t in ("v6", "v7", "tpu7"))
# Chips whose single Pallas device spans 2 TensorCores (megacore / v7x):
# make the batch grid have an even number of >= 2 "parallel" steps.
_N_TENSORCORES = 2 if any(t in _KIND for t in ("v4", "v5p", "v7", "tpu7")) else 1


def _make_kernel(mxu_layer1: bool):
    """Whole 4-layer MLP for one batch tile, fully resident in VMEM.

    The epilogue dtype (f32 on v5e, bf16 on v6e/v7x) is carried by the bias
    dtypes, so one body serves both generations; only the layer-1 style
    (MXU dot vs. VPU broadcast-FMA) is selected at trace time.
    """

    def kernel(x_ref,
               w1_ref, b1_ref,
               w2_ref, b2_ref,
               w3_ref, b3_ref,
               w4_ref, b4_ref,
               o_ref):
        if mxu_layer1:
            # v6e/v7x: K padded to 128 -> a single tile-aligned MXU pass.
            h = jnp.dot(x_ref[...].astype(jnp.bfloat16), w1_ref[...],
                        preferred_element_type=jnp.float32)
        else:
            # v5e: K=2 contraction as a VPU broadcast-FMA (MXU stays free
            # for the three 512-wide matmuls).
            x = x_ref[...]
            w1 = w1_ref[...]
            h = x[:, 0:1] * w1[0:1, :] + x[:, 1:2] * w1[1:2, :]

        # Bias + ReLU run in the bias dtype (bf16 on v6e/v7x, f32 on v5e);
        # matmul operands are always bf16 with f32 accumulation.
        h = jnp.maximum(h.astype(b1_ref.dtype) + b1_ref[...], 0.0)
        h = h.astype(jnp.bfloat16)

        h = jnp.dot(h, w2_ref[...], preferred_element_type=jnp.float32)
        h = jnp.maximum(h.astype(b2_ref.dtype) + b2_ref[...], 0.0)
        h = h.astype(jnp.bfloat16)

        h = jnp.dot(h, w3_ref[...], preferred_element_type=jnp.float32)
        h = jnp.maximum(h.astype(b3_ref.dtype) + b3_ref[...], 0.0)
        h = h.astype(jnp.bfloat16)

        # Layer 4: padded (512, 128) weight -> lane-dense (tb, 128) bf16 store.
        out = jnp.dot(h, w4_ref[...], preferred_element_type=jnp.float32)
        o_ref[...] = (out.astype(b4_ref.dtype) + b4_ref[...]).astype(o_ref.dtype)

    return kernel


def prepare_params(params_f32, *, bf16_epilogue=_HAS_BF16_VPU):
    """Cast big weights to bf16, lane-pad the last layer, pick epilogue dtype."""
    w1 = params_f32["w1"]
    w4 = jnp.pad(params_f32["w4"], ((0, 0), (0, OUT_PAD - OUT_FEATURES)))
    b4 = jnp.pad(params_f32["b4"], ((0, 0), (0, OUT_PAD - OUT_FEATURES)))
    if bf16_epilogue:
        # Layer 1 on the MXU: zero-pad K 2 -> 128 (tile aligned), bf16 biases.
        w1 = jnp.pad(w1, ((0, IN_PAD_MXU - IN_FEATURES), (0, 0))).astype(jnp.bfloat16)
        bias_dtype = jnp.bfloat16
    else:
        # Layer 1 on the VPU: keep (2, 512) f32; f32 biases (no bf16 VPU on v5e).
        w1 = w1.astype(jnp.float32)
        bias_dtype = jnp.float32
    return {
        "w1": w1,
        "b1": params_f32["b1"].astype(bias_dtype),
        "w2": params_f32["w2"].astype(jnp.bfloat16),
        "b2": params_f32["b2"].astype(bias_dtype),
        "w3": params_f32["w3"].astype(jnp.bfloat16),
        "b3": params_f32["b3"].astype(bias_dtype),
        "w4": w4.astype(jnp.bfloat16),
        "b4": b4.astype(bias_dtype),
    }


@functools.partial(jax.jit, static_argnames=("tb",))
def generator_forward(noise, params, *, tb=512):
    """Pallas forward pass of the Generator.

    noise:  (B, 2) float32
    params: output of prepare_params
    """
    B, fin = noise.shape
    assert fin == IN_FEATURES and B >= 1

    # --- batch tiling: balanced steps, 16-row-aligned tile, minimal padding ---
    tb = max(int(tb), 16)
    steps = max(1, pl.cdiv(B, tb))
    if _N_TENSORCORES > 1 and B >= 16 * _N_TENSORCORES:
        steps = _round_up(max(steps, _N_TENSORCORES), _N_TENSORCORES)
    tb_eff = _round_up(pl.cdiv(B, steps), 16)   # 16: bf16 output sublane pack
    b_pad = steps * tb_eff

    w1 = params["w1"]
    in_cols = w1.shape[0]                 # 2 (VPU layer 1) or 128 (MXU layer 1)
    mxu_layer1 = in_cols != IN_FEATURES

    noise_p = noise
    if b_pad != B or in_cols != IN_FEATURES:
        noise_p = jnp.pad(noise, ((0, b_pad - B), (0, in_cols - IN_FEATURES)))

    b1 = params["b1"]
    w2, b2 = params["w2"], params["b2"]
    w3, b3 = params["w3"], params["b3"]
    w4, b4 = params["w4"], params["b4"]

    # All weights replicated per batch tile (~0.7 MB bf16 — trivially VMEM
    # resident on every generation incl. v7x's 64 MiB); only batch is gridded.
    full = lambda shape: pl.BlockSpec(shape, lambda i: (0, 0))

    flops = 2 * b_pad * (in_cols * DIM + 2 * DIM * DIM + DIM * OUT_PAD)
    bytes_accessed = int(
        noise_p.size * noise_p.dtype.itemsize
        + b_pad * OUT_PAD * 2      # bf16 output
        + sum(int(v.size) * v.dtype.itemsize
              for v in (w1, b1, w2, b2, w3, b3, w4, b4)))
    cost = pl.CostEstimate(flops=flops, transcendentals=0,
                           bytes_accessed=bytes_accessed)

    out_padded = pl.pallas_call(
        _make_kernel(mxu_layer1),
        out_shape=jax.ShapeDtypeStruct((b_pad, OUT_PAD), jnp.bfloat16),
        grid_spec=pltpu.PrefetchScalarGridSpec(
            num_scalar_prefetch=0,
            grid=(steps,),
            in_specs=[
                pl.BlockSpec((tb_eff, in_cols), lambda i: (i, 0)),  # noise tile
                full(w1.shape), full(b1.shape),
                full(w2.shape), full(b2.shape),
                full(w3.shape), full(b3.shape),
                full(w4.shape), full(b4.shape),
            ],
            out_specs=pl.BlockSpec((tb_eff, OUT_PAD), lambda i: (i, 0)),
        ),
        compiler_params=pltpu.CompilerParams(
            dimension_semantics=("parallel",),
            vmem_limit_bytes=32 * 1024 * 1024),
        cost_estimate=cost,
    )(noise_p, w1, b1, w2, b2, w3, b3, w4, b4)

    return out_padded[:B, :OUT_FEATURES].astype(noise.dtype)


def init_params(key):
    """Deterministic init mimicking nn.Linear default: U(-1/sqrt(fan_in), +)."""
    dims = [(IN_FEATURES, DIM), (DIM, DIM), (DIM, DIM), (DIM, OUT_FEATURES)]
    params = {}
    for idx, (fan_in, fan_out) in enumerate(dims, start=1):
        key, kw, kb = jax.random.split(key, 3)
        bound = 1.0 / jnp.sqrt(jnp.float32(fan_in))
        params[f"w{idx}"] = jax.random.uniform(
            kw, (fan_in, fan_out), jnp.float32, -bound, bound)
        params[f"b{idx}"] = jax.random.uniform(
            kb, (1, fan_out), jnp.float32, -bound, bound)
    return params


def _reference_forward_f32(noise, params):
    """Pure-f32 reference matching the PyTorch module semantics."""
    h = jnp.maximum(noise @ params["w1"] + params["b1"], 0.0)
    h = jnp.maximum(h @ params["w2"] + params["b2"], 0.0)
    h = jnp.maximum(h @ params["w3"] + params["b3"], 0.0)
    return h @ params["w4"] + params["b4"]


def _reference_forward_matched(noise, prepared):
    """Reference replaying the kernel's exact cast sequence (tight tolerance)."""
    w1 = prepared["w1"]
    b1, b2, b3, b4 = prepared["b1"], prepared["b2"], prepared["b3"], prepared["b4"]
    mxu_layer1 = w1.shape[0] != IN_FEATURES
    if mxu_layer1:
        x = jnp.pad(noise, ((0, 0), (0, w1.shape[0] - IN_FEATURES)))
        h = jnp.dot(x.astype(jnp.bfloat16), w1, preferred_element_type=jnp.float32)
    else:
        x = noise.astype(jnp.float32)
        h = x[:, 0:1] * w1[0:1, :] + x[:, 1:2] * w1[1:2, :]
    h = jnp.maximum(h.astype(b1.dtype) + b1, 0.0).astype(jnp.bfloat16)
    h = jnp.dot(h, prepared["w2"], preferred_element_type=jnp.float32)
    h = jnp.maximum(h.astype(b2.dtype) + b2, 0.0).astype(jnp.bfloat16)
    h = jnp.dot(h, prepared["w3"], preferred_element_type=jnp.float32)
    h = jnp.maximum(h.astype(b3.dtype) + b3, 0.0).astype(jnp.bfloat16)
    out = jnp.dot(h, prepared["w4"], preferred_element_type=jnp.float32)
    out = (out.astype(b4.dtype) + b4).astype(jnp.bfloat16)
    return out[:, :OUT_FEATURES].astype(noise.dtype)


if __name__ == "__main__":
    key = jax.random.PRNGKey(0)
    key, knoise_small, knoise_big = jax.random.split(key, 3)

    params_f32 = init_params(key)
    params = prepare_params(params_f32)

    # Small batch (single step, or 2 balanced steps on megacore/v7x chips).
    B_small = 64
    noise_small = jax.random.normal(knoise_small, (B_small, IN_FEATURES), jnp.float32)
    out_small = jax.block_until_ready(generator_forward(noise_small, params))
    assert out_small.shape == (B_small, OUT_FEATURES)
    assert out_small.dtype == jnp.float32

    ref_matched = _reference_forward_matched(noise_small, params)
    ref_f32 = _reference_forward_f32(noise_small, params_f32)
    # Tight check vs. a cast-matched reference (1 bf16 ulp of slack for MXU
    # accumulation-order differences), loose check vs. the pure-f32 module.
    assert jnp.allclose(out_small, ref_matched, atol=1e-2, rtol=1e-2), \
        "mismatch vs. bf16-matched JAX reference"
    assert jnp.allclose(out_small, ref_f32, atol=5e-2, rtol=5e-2), \
        "mismatch vs. f32 JAX reference"

    # Larger, non-tile-multiple batch: exercises the balanced multi-step grid
    # (600 -> 2 steps of 304 rows) and the batch-padding path.
    B_big = 600
    noise_big = jax.random.normal(knoise_big, (B_big, IN_FEATURES), jnp.float32)
    out_big = jax.block_until_ready(generator_forward(noise_big, params))
    assert out_big.shape == (B_big, OUT_FEATURES)
    ref_big = _reference_forward_matched(noise_big, params)
    assert jnp.allclose(out_big, ref_big, atol=1e-2, rtol=1e-2), \
        "mismatch vs. bf16-matched JAX reference (batched)"

    print("KERNEL_OK")
</pallas_src>

<mosaic_0001>
module attributes {stable_mosaic.version = 11 : i64} {
  func.func @kernel(%arg0: i32, %arg1: memref<64x2xf32, #tpu.memory_space<vmem>>, %arg2: memref<2x512xf32, #tpu.memory_space<vmem>>, %arg3: memref<1x512xf32, #tpu.memory_space<vmem>>, %arg4: memref<512x512xbf16, #tpu.memory_space<vmem>>, %arg5: memref<1x512xf32, #tpu.memory_space<vmem>>, %arg6: memref<512x512xbf16, #tpu.memory_space<vmem>>, %arg7: memref<1x512xf32, #tpu.memory_space<vmem>>, %arg8: memref<512x128xbf16, #tpu.memory_space<vmem>>, %arg9: memref<1x128xf32, #tpu.memory_space<vmem>>, %arg10: memref<64x128xbf16, #tpu.memory_space<vmem>>) attributes {dimension_semantics = [#tpu.dimension_semantics<parallel>], iteration_bounds = array<i64: 1>, scalar_prefetch = 0 : i64, scratch_operands = 0 : i64, tpu.core_type = #tpu.core_type<tc>, window_params = [{transform_indices = @transform_0, window_bounds = array<i64: 64, 2>}, {pipeline_mode = #tpu.pipeline_mode<synchronous>, transform_indices = @transform_1, window_bounds = array<i64: 2, 512>}, {pipeline_mode = #tpu.pipeline_mode<synchronous>, transform_indices = @transform_2, window_bounds = array<i64: 1, 512>}, {pipeline_mode = #tpu.pipeline_mode<synchronous>, transform_indices = @transform_3, window_bounds = array<i64: 512, 512>}, {pipeline_mode = #tpu.pipeline_mode<synchronous>, transform_indices = @transform_4, window_bounds = array<i64: 1, 512>}, {pipeline_mode = #tpu.pipeline_mode<synchronous>, transform_indices = @transform_5, window_bounds = array<i64: 512, 512>}, {pipeline_mode = #tpu.pipeline_mode<synchronous>, transform_indices = @transform_6, window_bounds = array<i64: 1, 512>}, {pipeline_mode = #tpu.pipeline_mode<synchronous>, transform_indices = @transform_7, window_bounds = array<i64: 512, 128>}, {pipeline_mode = #tpu.pipeline_mode<synchronous>, transform_indices = @transform_8, window_bounds = array<i64: 1, 128>}, {transform_indices = @transform_9, window_bounds = array<i64: 64, 128>}]} {
    %c0 = arith.constant 0 : index
    %c0_0 = arith.constant 0 : index
    %0 = vector.load %arg1[%c0, %c0_0] : memref<64x2xf32, #tpu.memory_space<vmem>>, vector<64x2xf32>
    %c0_1 = arith.constant 0 : index
    %c0_2 = arith.constant 0 : index
    %1 = vector.load %arg2[%c0_1, %c0_2] : memref<2x512xf32, #tpu.memory_space<vmem>>, vector<2x512xf32>
    %2 = vector.extract_strided_slice %0 {offsets = [0, 0], sizes = [64, 1], strides = [1, 1]} : vector<64x2xf32> to vector<64x1xf32>
    %3 = vector.extract_strided_slice %1 {offsets = [0, 0], sizes = [1, 512], strides = [1, 1]} : vector<2x512xf32> to vector<1x512xf32>
    %4 = vector.broadcast %2 : vector<64x1xf32> to vector<64x512xf32>
    %5 = vector.broadcast %3 : vector<1x512xf32> to vector<64x512xf32>
    %6 = arith.mulf %4, %5 : vector<64x512xf32>
    %7 = vector.extract_strided_slice %0 {offsets = [0, 1], sizes = [64, 1], strides = [1, 1]} : vector<64x2xf32> to vector<64x1xf32>
    %8 = vector.extract_strided_slice %1 {offsets = [1, 0], sizes = [1, 512], strides = [1, 1]} : vector<2x512xf32> to vector<1x512xf32>
    %9 = vector.broadcast %7 : vector<64x1xf32> to vector<64x512xf32>
    %10 = vector.broadcast %8 : vector<1x512xf32> to vector<64x512xf32>
    %11 = arith.mulf %9, %10 : vector<64x512xf32>
    %12 = arith.addf %6, %11 : vector<64x512xf32>
    %c0_3 = arith.constant 0 : index
    %c0_4 = arith.constant 0 : index
    %13 = vector.load %arg3[%c0_3, %c0_4] : memref<1x512xf32, #tpu.memory_space<vmem>>, vector<1x512xf32>
    %14 = vector.broadcast %13 : vector<1x512xf32> to vector<64x512xf32>
    %15 = arith.addf %12, %14 : vector<64x512xf32>
    %cst = arith.constant 0.000000e+00 : f32
    %16 = vector.broadcast %cst : f32 to vector<64x512xf32>
    %17 = arith.maximumf %15, %16 : vector<64x512xf32>
    %18 = arith.truncf %17 : vector<64x512xf32> to vector<64x512xbf16>
    %c0_5 = arith.constant 0 : index
    %c0_6 = arith.constant 0 : index
    %19 = vector.load %arg4[%c0_5, %c0_6] : memref<512x512xbf16, #tpu.memory_space<vmem>>, vector<512x512xbf16>
    %cst_7 = arith.constant dense<0.000000e+00> : vector<64x512xf32>
    %20 = tpu.matmul %18, %19, %cst_7 {dimension_numbers = #tpu.dot_dimension_numbers<[1], [0], [0], [1], [0, 0, 1, 1], [], []>} : vector<64x512xbf16>, vector<512x512xbf16>, vector<64x512xf32> -> vector<64x512xf32>
    %c0_8 = arith.constant 0 : index
    %c0_9 = arith.constant 0 : index
    %21 = vector.load %arg5[%c0_8, %c0_9] : memref<1x512xf32, #tpu.memory_space<vmem>>, vector<1x512xf32>
    %22 = vector.broadcast %21 : vector<1x512xf32> to vector<64x512xf32>
    %23 = arith.addf %20, %22 : vector<64x512xf32>
    %cst_10 = arith.constant 0.000000e+00 : f32
    %24 = vector.broadcast %cst_10 : f32 to vector<64x512xf32>
    %25 = arith.maximumf %23, %24 : vector<64x512xf32>
    %26 = arith.truncf %25 : vector<64x512xf32> to vector<64x512xbf16>
    %c0_11 = arith.constant 0 : index
    %c0_12 = arith.constant 0 : index
    %27 = vector.load %arg6[%c0_11, %c0_12] : memref<512x512xbf16, #tpu.memory_space<vmem>>, vector<512x512xbf16>
    %cst_13 = arith.constant dense<0.000000e+00> : vector<64x512xf32>
    %28 = tpu.matmul %26, %27, %cst_13 {dimension_numbers = #tpu.dot_dimension_numbers<[1], [0], [0], [1], [0, 0, 1, 1], [], []>} : vector<64x512xbf16>, vector<512x512xbf16>, vector<64x512xf32> -> vector<64x512xf32>
    %c0_14 = arith.constant 0 : index
    %c0_15 = arith.constant 0 : index
    %29 = vector.load %arg7[%c0_14, %c0_15] : memref<1x512xf32, #tpu.memory_space<vmem>>, vector<1x512xf32>
    %30 = vector.broadcast %29 : vector<1x512xf32> to vector<64x512xf32>
    %31 = arith.addf %28, %30 : vector<64x512xf32>
    %cst_16 = arith.constant 0.000000e+00 : f32
    %32 = vector.broadcast %cst_16 : f32 to vector<64x512xf32>
    %33 = arith.maximumf %31, %32 : vector<64x512xf32>
    %34 = arith.truncf %33 : vector<64x512xf32> to vector<64x512xbf16>
    %c0_17 = arith.constant 0 : index
    %c0_18 = arith.constant 0 : index
    %35 = vector.load %arg8[%c0_17, %c0_18] : memref<512x128xbf16, #tpu.memory_space<vmem>>, vector<512x128xbf16>
    %cst_19 = arith.constant dense<0.000000e+00> : vector<64x128xf32>
    %36 = tpu.matmul %34, %35, %cst_19 {dimension_numbers = #tpu.dot_dimension_numbers<[1], [0], [0], [1], [0, 0, 1, 1], [], []>} : vector<64x512xbf16>, vector<512x128xbf16>, vector<64x128xf32> -> vector<64x128xf32>
    %c0_20 = arith.constant 0 : index
    %c0_21 = arith.constant 0 : index
    %37 = vector.load %arg9[%c0_20, %c0_21] : memref<1x128xf32, #tpu.memory_space<vmem>>, vector<1x128xf32>
    %38 = vector.broadcast %37 : vector<1x128xf32> to vector<64x128xf32>
    %39 = arith.addf %36, %38 : vector<64x128xf32>
    %40 = arith.truncf %39 : vector<64x128xf32> to vector<64x128xbf16>
    %c0_22 = arith.constant 0 : index
    %c0_23 = arith.constant 0 : index
    %41 = vector.load %arg10[%c0_22, %c0_23] : memref<64x128xbf16, #tpu.memory_space<vmem>>, vector<64x128xbf16>
    tpu.vector_store %arg10[%c0_22, %c0_23], %40 {strides = array<i32>} : memref<64x128xbf16, #tpu.memory_space<vmem>>, vector<64x128xbf16>,
    return
  }
  func.func @transform_0(%arg0: i32) -> (i32, i32) {
    %c0_i32 = arith.constant 0 : i32
    %c0_i32_0 = arith.constant 0 : i32
    return %arg0, %c0_i32 : i32, i32
  }
  func.func @transform_1(%arg0: i32) -> (i32, i32) {
    %c0_i32 = arith.constant 0 : i32
    %c0_i32_0 = arith.constant 0 : i32
    %c0_i32_1 = arith.constant 0 : i32
    return %c0_i32, %c0_i32_0 : i32, i32
  }
  func.func @transform_2(%arg0: i32) -> (i32, i32) {
    %c0_i32 = arith.constant 0 : i32
    %c0_i32_0 = arith.constant 0 : i32
    %c0_i32_1 = arith.constant 0 : i32
    return %c0_i32, %c0_i32_0 : i32, i32
  }
  func.func @transform_3(%arg0: i32) -> (i32, i32) {
    %c0_i32 = arith.constant 0 : i32
    %c0_i32_0 = arith.constant 0 : i32
    %c0_i32_1 = arith.constant 0 : i32
    return %c0_i32, %c0_i32_0 : i32, i32
  }
  func.func @transform_4(%arg0: i32) -> (i32, i32) {
    %c0_i32 = arith.constant 0 : i32
    %c0_i32_0 = arith.constant 0 : i32
    %c0_i32_1 = arith.constant 0 : i32
    return %c0_i32, %c0_i32_0 : i32, i32
  }
  func.func @transform_5(%arg0: i32) -> (i32, i32) {
    %c0_i32 = arith.constant 0 : i32
    %c0_i32_0 = arith.constant 0 : i32
    %c0_i32_1 = arith.constant 0 : i32
    return %c0_i32, %c0_i32_0 : i32, i32
  }
  func.func @transform_6(%arg0: i32) -> (i32, i32) {
    %c0_i32 = arith.constant 0 : i32
    %c0_i32_0 = arith.constant 0 : i32
    %c0_i32_1 = arith.constant 0 : i32
    return %c0_i32, %c0_i32_0 : i32, i32
  }
  func.func @transform_7(%arg0: i32) -> (i32, i32) {
    %c0_i32 = arith.constant 0 : i32
    %c0_i32_0 = arith.constant 0 : i32
    %c0_i32_1 = arith.constant 0 : i32
    return %c0_i32, %c0_i32_0 : i32, i32
  }
  func.func @transform_8(%arg0: i32) -> (i32, i32) {
    %c0_i32 = arith.constant 0 : i32
    %c0_i32_0 = arith.constant 0 : i32
    %c0_i32_1 = arith.constant 0 : i32
    return %c0_i32, %c0_i32_0 : i32, i32
  }
  func.func @transform_9(%arg0: i32) -> (i32, i32) {
    %c0_i32 = arith.constant 0 : i32
    %c0_i32_0 = arith.constant 0 : i32
    return %arg0, %c0_i32 : i32, i32
  }
}

</mosaic_0001>

<llo_original>
// kernel: generator_forward.1
$region0: #{generator_forward.1}
  #allocation0 [shape = 'u32[]', space=smem, size = 0x4, offset = 0x4, fixed_abs, tag = 'smem constant byte address 0x4 - core index']
  #allocation1 [shape = 'u32[144,128]{1,0:T(1,128)}', space=vmem, size = 0x12000, scoped, tag = 'internal scratch']
  %s0 = inlined_call_operand.vmem [shape: f32[64,2], index: 0, kind: input, shape index: {}]
  %s1 = inlined_call_operand.vmem [shape: f32[2,512], index: 1, kind: input, shape index: {}]
  %s2 = inlined_call_operand.vmem [shape: f32[1,512], index: 2, kind: input, shape index: {}]
  %s3 = inlined_call_operand.hbm [shape: bf16[512,512], index: 3, kind: input, shape index: {}]
  %s4 = inlined_call_operand.vmem [shape: f32[1,512], index: 4, kind: input, shape index: {}]
  %s5 = inlined_call_operand.hbm [shape: bf16[512,512], index: 5, kind: input, shape index: {}]
  %s6 = inlined_call_operand.vmem [shape: f32[1,512], index: 6, kind: input, shape index: {}]
  %s7 = inlined_call_operand.hbm [shape: bf16[512,128], index: 7, kind: input, shape index: {}]
  %s8 = inlined_call_operand.vmem [shape: f32[1,128], index: 8, kind: input, shape index: {}]
  %s9 = inlined_call_operand.vmem [shape: bf16[64,128], index: 9, kind: output, shape index: {}]
  %s10 = sld [smem:[#allocation0]]
  $region58: #{generator_forward.1} parent=0
    _
  %s12 = ssub.s32 1, %s10
  %s13 = scalar_select 0, %s12, %s10
  $region1: #{generator_forward.1} parent=0
    #allocation2 [shape = 'u8[524288]{0}', space=vmem, size = 0x80000, scoped, tag = 'input window, operand 3, single buffered']
    #allocation3 [shape = 's32[1]{0}', space=sflag, size = 0x4, scoped, tag = 'scoped memory for generator_forward.1']
    #allocation4 [shape = 'u8[524288]{0}', space=vmem, size = 0x80000, scoped, tag = 'input window, operand 5, single buffered']
    #allocation5 [shape = 's32[1]{0}', space=sflag, size = 0x4, scoped, tag = 'scoped memory for generator_forward.1']
    #allocation6 [shape = 'u8[131072]{0}', space=vmem, size = 0x20000, scoped, tag = 'input window, operand 7, single buffered']
    %14 = vsyncpa [#allocation3], 0
    %15 = vsyncpa [#allocation5], 0
    // Predicated region
    $region2: #{generator_forward.1} parent=1 // pred_check
      _
    $region3: #{generator_forward.1} parent=1 // pred_check_branch
      %17 = sbr.rel (0) target = $region5
    $region4: #{generator_forward.1} parent=1 // pred_region
      _
    $region5: #{generator_forward.1} parent=1 // pred_fallthru
      _
    // Predicated region
    $region6: #{generator_forward.1} parent=1 // pred_check
      _
    $region7: #{generator_forward.1} parent=1 // pred_check_branch
      %19 = sbr.rel (0) target = $region9
    $region8: #{generator_forward.1} parent=1 // pred_region
      _
    $region9: #{generator_forward.1} parent=1 // pred_fallthru
      _
    // Predicated region
    $region10: #{generator_forward.1} parent=1 // pred_check
      _
    $region11: #{generator_forward.1} parent=1 // pred_check_branch
      %21 = sbr.rel (0) target = $region13
    $region12: #{generator_forward.1} parent=1 // pred_region
      _
    $region13: #{generator_forward.1} parent=1 // pred_fallthru
      _
    // Predicated region
    $region14: #{generator_forward.1} parent=1 // pred_check
      _
    $region15: #{generator_forward.1} parent=1 // pred_check_branch
      %23 = sbr.rel (0) target = $region17
    $region16: #{generator_forward.1} parent=1 // pred_region
      %s25 = ssub.s32 16384, 16384
      %26 = vsyncadd [#allocation3], %s25
      %s27 = sshll.u32 [#allocation2], 4
      %s28 = int_to_ptr.vmem [resolvable:$true] %s27
      %33 = dma.hbm_to_vmem [thread:$0]  %s3, 16384, %s28, [#allocation3], 256, 256, 16
    $region17: #{generator_forward.1} parent=1 // pred_fallthru
      _
    // Predicated region
    $region18: #{generator_forward.1} parent=1 // pred_check
      _
    $region19: #{generator_forward.1} parent=1 // pred_check_branch
      %35 = sbr.rel (0) target = $region21
    $region20: #{generator_forward.1} parent=1 // pred_region
      _
    $region21: #{generator_forward.1} parent=1 // pred_fallthru
      _
    // Predicated region
    $region22: #{generator_forward.1} parent=1 // pred_check
      _
    $region23: #{generator_forward.1} parent=1 // pred_check_branch
      %37 = sbr.rel (0) target = $region25
    $region24: #{generator_forward.1} parent=1 // pred_region
      %s39 = ssub.s32 16384, 16384
      %40 = vsyncadd [#allocation5], %s39
      %s41 = sshll.u32 [#allocation4], 4
      %s42 = int_to_ptr.vmem [resolvable:$true] %s41
      %47 = dma.hbm_to_vmem [thread:$0]  %s5, 16384, %s42, [#allocation5], 256, 256, 16
    $region25: #{generator_forward.1} parent=1 // pred_fallthru
      _
    // Predicated region
    $region26: #{generator_forward.1} parent=1 // pred_check
      _
    $region27: #{generator_forward.1} parent=1 // pred_check_branch
      %49 = sbr.rel (0) target = $region29
    $region28: #{generator_forward.1} parent=1 // pred_region
      _
    $region29: #{generator_forward.1} parent=1 // pred_fallthru
      _
    // Predicated region
    $region30: #{generator_forward.1} parent=1 // pred_check
      _
    $region31: #{generator_forward.1} parent=1 // pred_check_branch
      %51 = sbr.rel (0) target = $region33
    $region32: #{generator_forward.1} parent=1 // pred_region
      %s53 = ssub.s32 4096, 4096
      %54 = vsyncadd [#allocation5], %s53
      %s55 = sshll.u32 [#allocation6], 4
      %s56 = int_to_ptr.vmem [resolvable:$true] %s55
      %61 = dma.hbm_to_vmem [thread:$0]  %s7, 4096, %s56, [#allocation5], 64, 64, 4
    $region33: #{generator_forward.1} parent=1 // pred_fallthru
      _
    // Predicated region
    $region34: #{generator_forward.1} parent=1 // pred_check
      _
    $region35: #{generator_forward.1} parent=1 // pred_check_branch
      %63 = sbr.rel (0) target = $region37
    $region36: #{generator_forward.1} parent=1 // pred_region
      _
    $region37: #{generator_forward.1} parent=1 // pred_fallthru
      _
    // Predicated region
    $region38: #{generator_forward.1} parent=1 // pred_check
      _
    $region39: #{generator_forward.1} parent=1 // pred_check_branch
      %65 = sbr.rel (0) target = $region41
    $region40: #{generator_forward.1} parent=1 // pred_region
      %66 = dma.done [#allocation3], 16384
    $region41: #{generator_forward.1} parent=1 // pred_fallthru
      _
    // Predicated region
    $region42: #{generator_forward.1} parent=1 // pred_check
      _
    $region43: #{generator_forward.1} parent=1 // pred_check_branch
      %68 = sbr.rel (0) target = $region45
    $region44: #{generator_forward.1} parent=1 // pred_region
      %69 = dma.done [#allocation5], 16384
    $region45: #{generator_forward.1} parent=1 // pred_fallthru
      _
    // Predicated region
    $region46: #{generator_forward.1} parent=1 // pred_check
      _
    $region47: #{generator_forward.1} parent=1 // pred_check_branch
      %71 = sbr.rel (0) target = $region49
    $region48: #{generator_forward.1} parent=1 // pred_region
      %72 = dma.done [#allocation5], 4096
    $region49: #{generator_forward.1} parent=1 // pred_fallthru
      _
    %v74 = vld [vmem:[%s0] sm:$0xff]
    %v75 = vld [vmem:[%s0 + $0x8] sm:$0xff]
    %v76 = vld [vmem:[%s0 + $0x10] sm:$0xff]
    %v77 = vld [vmem:[%s0 + $0x18] sm:$0xff]
    %v78 = vld [vmem:[%s0 + $0x20] sm:$0xff]
    %v79 = vld [vmem:[%s0 + $0x28] sm:$0xff]
    %v80 = vld [vmem:[%s0 + $0x30] sm:$0xff]
    %v81 = vld [vmem:[%s0 + $0x38] sm:$0xff]
    %v82 = vld [vmem:[%s1] sm:$0xff]
    %84 = vset.pattern.permute.xlu0 0
    %85 = vperm.xlu0 %84, %v74
    %v86 = vpop.permute.xlu0 %85
    %89 = vset.pattern.permute.xlu0 0
    %90 = vperm.xlu0 %89, %v75
    %v91 = vpop.permute.xlu0 %90
    %94 = vset.pattern.permute.xlu0 0
    %95 = vperm.xlu0 %94, %v76
    %v96 = vpop.permute.xlu0 %95
    %99 = vset.pattern.permute.xlu0 0
    %100 = vperm.xlu0 %99, %v77
    %v101 = vpop.permute.xlu0 %100
    %104 = vset.pattern.permute.xlu0 0
    %105 = vperm.xlu0 %104, %v78
    %v106 = vpop.permute.xlu0 %105
    %109 = vset.pattern.permute.xlu0 0
    %110 = vperm.xlu0 %109, %v79
    %v111 = vpop.permute.xlu0 %110
    %114 = vset.pattern.permute.xlu0 0
    %115 = vperm.xlu0 %114, %v80
    %v116 = vpop.permute.xlu0 %115
    %119 = vset.pattern.permute.xlu0 0
    %120 = vperm.xlu0 %119, %v81
    %v121 = vpop.permute.xlu0 %120
    %v124 = vlaneseq
    %v125 = vshrl.u32 %v124, 7
    %v126 = vsub.s32 0, %v125
    %v127 = vrot.slane %v82, %v126
    %v128 = vlaneseq
    %v129 = vshrl.u32 %v128, 7
    %v130 = vsub.s32 2, %v129
    %v131 = vrot.slane %v82, %v130
    %v132 = vlaneseq
    %v133 = vshrl.u32 %v132, 7
    %v134 = vsub.s32 4, %v133
    %v135 = vrot.slane %v82, %v134
    %v136 = vlaneseq
    %v137 = vshrl.u32 %v136, 7
    %v138 = vsub.s32 6, %v137
    %v139 = vrot.slane %v82, %v138
    %v144 = vlaneseq
    %v145 = vshrl.u32 %v144, 7
    %v146 = vsub.s32 0, %v145
    %v147 = vrot.slane %v127, %v146
    %v148 = vlaneseq
    %v149 = vshrl.u32 %v148, 7
    %v150 = vsub.s32 0, %v149
    %v151 = vrot.slane %v131, %v150
    %v152 = vlaneseq
    %v153 = vshrl.u32 %v152, 7
    %v154 = vsub.s32 0, %v153
    %v155 = vrot.slane %v135, %v154
    %v156 = vlaneseq
    %v157 = vshrl.u32 %v156, 7
    %v158 = vsub.s32 0, %v157
    %v159 = vrot.slane %v139, %v158
    %v160 = vmul.f32 %v86, %v147
    %v161 = vmul.f32 %v86, %v151
    %v162 = vmul.f32 %v86, %v155
    %v163 = vmul.f32 %v86, %v159
    %v164 = vmul.f32 %v91, %v147
    %v165 = vmul.f32 %v91, %v151
    %v166 = vmul.f32 %v91, %v155
    %v167 = vmul.f32 %v91, %v159
    %v168 = vmul.f32 %v96, %v147
    %v169 = vmul.f32 %v96, %v151
    %v170 = vmul.f32 %v96, %v155
    %v171 = vmul.f32 %v96, %v159
    %v172 = vmul.f32 %v101, %v147
    %v173 = vmul.f32 %v101, %v151
    %v174 = vmul.f32 %v101, %v155
    %v175 = vmul.f32 %v101, %v159
    %v176 = vmul.f32 %v106, %v147
    %v177 = vmul.f32 %v106, %v151
    %v178 = vmul.f32 %v106, %v155
    %v179 = vmul.f32 %v106, %v159
    %v180 = vmul.f32 %v111, %v147
    %v181 = vmul.f32 %v111, %v151
    %v182 = vmul.f32 %v111, %v155
    %v183 = vmul.f32 %v111, %v159
    %v184 = vmul.f32 %v116, %v147
    %v185 = vmul.f32 %v116, %v151
    %v186 = vmul.f32 %v116, %v155
    %v187 = vmul.f32 %v116, %v159
    %v188 = vmul.f32 %v121, %v147
    %v189 = vmul.f32 %v121, %v151
    %v190 = vmul.f32 %v121, %v155
    %v191 = vmul.f32 %v121, %v159
    %192 = vset.pattern.permute.xlu0 1
    %193 = vperm.xlu0 %192, %v74
    %v194 = vpop.permute.xlu0 %193
    %196 = vset.pattern.permute.xlu0 1
    %197 = vperm.xlu0 %196, %v75
    %v198 = vpop.permute.xlu0 %197
    %200 = vset.pattern.permute.xlu0 1
    %201 = vperm.xlu0 %200, %v76
    %v202 = vpop.permute.xlu0 %201
    %204 = vset.pattern.permute.xlu0 1
    %205 = vperm.xlu0 %204, %v77
    %v206 = vpop.permute.xlu0 %205
    %208 = vset.pattern.permute.xlu0 1
    %209 = vperm.xlu0 %208, %v78
    %v210 = vpop.permute.xlu0 %209
    %212 = vset.pattern.permute.xlu0 1
    %213 = vperm.xlu0 %212, %v79
    %v214 = vpop.permute.xlu0 %213
    %216 = vset.pattern.permute.xlu0 1
    %217 = vperm.xlu0 %216, %v80
    %v218 = vpop.permute.xlu0 %217
    %220 = vset.pattern.permute.xlu0 1
    %221 = vperm.xlu0 %220, %v81
    %v222 = vpop.permute.xlu0 %221
    %v224 = vlaneseq
    %v225 = vshrl.u32 %v224, 7
    %v226 = vsub.s32 1, %v225
    %v227 = vrot.slane %v82, %v226
    %v228 = vlaneseq
    %v229 = vshrl.u32 %v228, 7
    %v230 = vsub.s32 3, %v229
    %v231 = vrot.slane %v82, %v230
    %v232 = vlaneseq
    %v233 = vshrl.u32 %v232, 7
    %v234 = vsub.s32 5, %v233
    %v235 = vrot.slane %v82, %v234
    %v236 = vlaneseq
    %v237 = vshrl.u32 %v236, 7
    %v238 = vsub.s32 7, %v237
    %v239 = vrot.slane %v82, %v238
    %v244 = vlaneseq
    %v245 = vshrl.u32 %v244, 7
    %v246 = vsub.s32 1, %v245
    %v247 = vrot.slane %v227, %v246
    %v248 = vlaneseq
    %v249 = vshrl.u32 %v248, 7
    %v250 = vsub.s32 1, %v249
    %v251 = vrot.slane %v231, %v250
    %v252 = vlaneseq
    %v253 = vshrl.u32 %v252, 7
    %v254 = vsub.s32 1, %v253
    %v255 = vrot.slane %v235, %v254
    %v256 = vlaneseq
    %v257 = vshrl.u32 %v256, 7
    %v258 = vsub.s32 1, %v257
    %v259 = vrot.slane %v239, %v258
    %v260 = vmul.f32 %v194, %v247
    %v261 = vmul.f32 %v194, %v251
    %v262 = vmul.f32 %v194, %v255
    %v263 = vmul.f32 %v194, %v259
    %v264 = vmul.f32 %v198, %v247
    %v265 = vmul.f32 %v198, %v251
    %v266 = vmul.f32 %v198, %v255
    %v267 = vmul.f32 %v198, %v259
    %v268 = vmul.f32 %v202, %v247
    %v269 = vmul.f32 %v202, %v251
    %v270 = vmul.f32 %v202, %v255
    %v271 = vmul.f32 %v202, %v259
    %v272 = vmul.f32 %v206, %v247
    %v273 = vmul.f32 %v206, %v251
    %v274 = vmul.f32 %v206, %v255
    %v275 = vmul.f32 %v206, %v259
    %v276 = vmul.f32 %v210, %v247
    %v277 = vmul.f32 %v210, %v251
    %v278 = vmul.f32 %v210, %v255
    %v279 = vmul.f32 %v210, %v259
    %v280 = vmul.f32 %v214, %v247
    %v281 = vmul.f32 %v214, %v251
    %v282 = vmul.f32 %v214, %v255
    %v283 = vmul.f32 %v214, %v259
    %v284 = vmul.f32 %v218, %v247
    %v285 = vmul.f32 %v218, %v251
    %v286 = vmul.f32 %v218, %v255
    %v287 = vmul.f32 %v218, %v259
    %v288 = vmul.f32 %v222, %v247
    %v289 = vmul.f32 %v222, %v251
    %v290 = vmul.f32 %v222, %v255
    %v291 = vmul.f32 %v222, %v259
    %v292 = vadd.f32 %v160, %v260
    %v293 = vadd.f32 %v161, %v261
    %v294 = vadd.f32 %v162, %v262
    %v295 = vadd.f32 %v163, %v263
    %v296 = vadd.f32 %v164, %v264
    %v297 = vadd.f32 %v165, %v265
    %v298 = vadd.f32 %v166, %v266
    %v299 = vadd.f32 %v167, %v267
    %v300 = vadd.f32 %v168, %v268
    %v301 = vadd.f32 %v169, %v269
    %v302 = vadd.f32 %v170, %v270
    %v303 = vadd.f32 %v171, %v271
    %v304 = vadd.f32 %v172, %v272
    %v305 = vadd.f32 %v173, %v273
    %v306 = vadd.f32 %v174, %v274
    %v307 = vadd.f32 %v175, %v275
    %v308 = vadd.f32 %v176, %v276
    %v309 = vadd.f32 %v177, %v277
    %v310 = vadd.f32 %v178, %v278
    %v311 = vadd.f32 %v179, %v279
    %v312 = vadd.f32 %v180, %v280
    %v313 = vadd.f32 %v181, %v281
    %v314 = vadd.f32 %v182, %v282
    %v315 = vadd.f32 %v183, %v283
    %v316 = vadd.f32 %v184, %v284
    %v317 = vadd.f32 %v185, %v285
    %v318 = vadd.f32 %v186, %v286
    %v319 = vadd.f32 %v187, %v287
    %v320 = vadd.f32 %v188, %v288
    %v321 = vadd.f32 %v189, %v289
    %v322 = vadd.f32 %v190, %v290
    %v323 = vadd.f32 %v191, %v291
    %v324 = vld [vmem:[%s2] sm:$0xf]
    %v326 = vlaneseq
    %v327 = vshrl.u32 %v326, 7
    %v328 = vsub.s32 0, %v327
    %v329 = vrot.slane %v324, %v328
    %v330 = vlaneseq
    %v331 = vshrl.u32 %v330, 7
    %v332 = vsub.s32 1, %v331
    %v333 = vrot.slane %v324, %v332
    %v334 = vlaneseq
    %v335 = vshrl.u32 %v334, 7
    %v336 = vsub.s32 2, %v335
    %v337 = vrot.slane %v324, %v336
    %v338 = vlaneseq
    %v339 = vshrl.u32 %v338, 7
    %v340 = vsub.s32 3, %v339
    %v341 = vrot.slane %v324, %v340
    %v346 = vadd.f32 %v292, %v329
    %v347 = vadd.f32 %v293, %v333
    %v348 = vadd.f32 %v294, %v337
    %v349 = vadd.f32 %v295, %v341
    %v350 = vadd.f32 %v296, %v329
    %v351 = vadd.f32 %v297, %v333
    %v352 = vadd.f32 %v298, %v337
    %v353 = vadd.f32 %v299, %v341
    %v354 = vadd.f32 %v300, %v329
    %v355 = vadd.f32 %v301, %v333
    %v356 = vadd.f32 %v302, %v337
    %v357 = vadd.f32 %v303, %v341
    %v358 = vadd.f32 %v304, %v329
    %v359 = vadd.f32 %v305, %v333
    %v360 = vadd.f32 %v306, %v337
    %v361 = vadd.f32 %v307, %v341
    %v362 = vadd.f32 %v308, %v329
    %v363 = vadd.f32 %v309, %v333
    %v364 = vadd.f32 %v310, %v337
    %v365 = vadd.f32 %v311, %v341
    %v366 = vadd.f32 %v312, %v329
    %v367 = vadd.f32 %v313, %v333
    %v368 = vadd.f32 %v314, %v337
    %v369 = vadd.f32 %v315, %v341
    %v370 = vadd.f32 %v316, %v329
    %v371 = vadd.f32 %v317, %v333
    %v372 = vadd.f32 %v318, %v337
    %v373 = vadd.f32 %v319, %v341
    %v374 = vadd.f32 %v320, %v329
    %v375 = vadd.f32 %v321, %v333
    %v376 = vadd.f32 %v322, %v337
    %v377 = vadd.f32 %v323, %v341
    %v378 = vmax.f32 %v346, 0.0
    %v379 = vmax.f32 %v347, 0.0
    %v380 = vmax.f32 %v348, 0.0
    %v381 = vmax.f32 %v349, 0.0
    %v382 = vmax.f32 %v350, 0.0
    %v383 = vmax.f32 %v351, 0.0
    %v384 = vmax.f32 %v352, 0.0
    %v385 = vmax.f32 %v353, 0.0
    %v386 = vmax.f32 %v354, 0.0
    %v387 = vmax.f32 %v355, 0.0
    %v388 = vmax.f32 %v356, 0.0
    %v389 = vmax.f32 %v357, 0.0
    %v390 = vmax.f32 %v358, 0.0
    %v391 = vmax.f32 %v359, 0.0
    %v392 = vmax.f32 %v360, 0.0
    %v393 = vmax.f32 %v361, 0.0
    %v394 = vmax.f32 %v362, 0.0
    %v395 = vmax.f32 %v363, 0.0
    %v396 = vmax.f32 %v364, 0.0
    %v397 = vmax.f32 %v365, 0.0
    %v398 = vmax.f32 %v366, 0.0
    %v399 = vmax.f32 %v367, 0.0
    %v400 = vmax.f32 %v368, 0.0
    %v401 = vmax.f32 %v369, 0.0
    %v402 = vmax.f32 %v370, 0.0
    %v403 = vmax.f32 %v371, 0.0
    %v404 = vmax.f32 %v372, 0.0
    %v405 = vmax.f32 %v373, 0.0
    %v406 = vmax.f32 %v374, 0.0
    %v407 = vmax.f32 %v375, 0.0
    %v408 = vmax.f32 %v376, 0.0
    %v409 = vmax.f32 %v377, 0.0
    %v410 = vpack.c.bf16 %v382, %v378
    %v411 = vpack.c.bf16 %v383, %v379
    %v412 = vpack.c.bf16 %v384, %v380
    %v413 = vpack.c.bf16 %v385, %v381
    %v414 = vpack.c.bf16 %v390, %v386
    %v415 = vpack.c.bf16 %v391, %v387
    %v416 = vpack.c.bf16 %v392, %v388
    %v417 = vpack.c.bf16 %v393, %v389
    %v418 = vpack.c.bf16 %v398, %v394
    %v419 = vpack.c.bf16 %v399, %v395
    %v420 = vpack.c.bf16 %v400, %v396
    %v421 = vpack.c.bf16 %v401, %v397
    %v422 = vpack.c.bf16 %v406, %v402
    %v423 = vpack.c.bf16 %v407, %v403
    %v424 = vpack.c.bf16 %v408, %v404
    %v425 = vpack.c.bf16 %v409, %v405
    %v426 = vld [vmem:[#allocation2] sm:$0xff]
    %v427 = vld [vmem:[#allocation2 + $0x8] sm:$0xff]
    %v428 = vld [vmem:[#allocation2 + $0x10] sm:$0xff]
    %v429 = vld [vmem:[#allocation2 + $0x18] sm:$0xff]
    %v430 = vld [vmem:[#allocation2 + $0x20] sm:$0xff]
    %v431 = vld [vmem:[#allocation2 + $0x28] sm:$0xff]
    %v432 = vld [vmem:[#allocation2 + $0x30] sm:$0xff]
    %v433 = vld [vmem:[#allocation2 + $0x38] sm:$0xff]
    %v434 = vld [vmem:[#allocation2 + $0x40] sm:$0xff]
    %v435 = vld [vmem:[#allocation2 + $0x48] sm:$0xff]
    %v436 = vld [vmem:[#allocation2 + $0x50] sm:$0xff]
    %v437 = vld [vmem:[#allocation2 + $0x58] sm:$0xff]
    %v438 = vld [vmem:[#allocation2 + $0x60] sm:$0xff]
    %v439 = vld [vmem:[#allocation2 + $0x68] sm:$0xff]
    %v440 = vld [vmem:[#allocation2 + $0x70] sm:$0xff]
    %v441 = vld [vmem:[#allocation2 + $0x78] sm:$0xff]
    %v442 = vld [vmem:[#allocation2 + $0x80] sm:$0xff]
    %v443 = vld [vmem:[#allocation2 + $0x88] sm:$0xff]
    %v444 = vld [vmem:[#allocation2 + $0x90] sm:$0xff]
    %v445 = vld [vmem:[#allocation2 + $0x98] sm:$0xff]
    %v446 = vld [vmem:[#allocation2 + $0xa0] sm:$0xff]
    %v447 = vld [vmem:[#allocation2 + $0xa8] sm:$0xff]
    %v448 = vld [vmem:[#allocation2 + $0xb0] sm:$0xff]
    %v449 = vld [vmem:[#allocation2 + $0xb8] sm:$0xff]
    %v450 = vld [vmem:[#allocation2 + $0xc0] sm:$0xff]
    %v451 = vld [vmem:[#allocation2 + $0xc8] sm:$0xff]
    %v452 = vld [vmem:[#allocation2 + $0xd0] sm:$0xff]
    %v453 = vld [vmem:[#allocation2 + $0xd8] sm:$0xff]
    %v454 = vld [vmem:[#allocation2 + $0xe0] sm:$0xff]
    %v455 = vld [vmem:[#allocation2 + $0xe8] sm:$0xff]
    %v456 = vld [vmem:[#allocation2 + $0xf0] sm:$0xff]
    %v457 = vld [vmem:[#allocation2 + $0xf8] sm:$0xff]
    %v458 = vld [vmem:[#allocation2 + $0x100] sm:$0xff]
    %v459 = vld [vmem:[#allocation2 + $0x108] sm:$0xff]
    %v460 = vld [vmem:[#allocation2 + $0x110] sm:$0xff]
    %v461 = vld [vmem:[#allocation2 + $0x118] sm:$0xff]
    %v462 = vld [vmem:[#allocation2 + $0x120] sm:$0xff]
    %v463 = vld [vmem:[#allocation2 + $0x128] sm:$0xff]
    %v464 = vld [vmem:[#allocation2 + $0x130] sm:$0xff]
    %v465 = vld [vmem:[#allocation2 + $0x138] sm:$0xff]
    %v466 = vld [vmem:[#allocation2 + $0x140] sm:$0xff]
    %v467 = vld [vmem:[#allocation2 + $0x148] sm:$0xff]
    %v468 = vld [vmem:[#allocation2 + $0x150] sm:$0xff]
    %v469 = vld [vmem:[#allocation2 + $0x158] sm:$0xff]
    %v470 = vld [vmem:[#allocation2 + $0x160] sm:$0xff]
    %v471 = vld [vmem:[#allocation2 + $0x168] sm:$0xff]
    %v472 = vld [vmem:[#allocation2 + $0x170] sm:$0xff]
    %v473 = vld [vmem:[#allocation2 + $0x178] sm:$0xff]
    %v474 = vld [vmem:[#allocation2 + $0x180] sm:$0xff]
    %v475 = vld [vmem:[#allocation2 + $0x188] sm:$0xff]
    %v476 = vld [vmem:[#allocation2 + $0x190] sm:$0xff]
    %v477 = vld [vmem:[#allocation2 + $0x198] sm:$0xff]
    %v478 = vld [vmem:[#allocation2 + $0x1a0] sm:$0xff]
    %v479 = vld [vmem:[#allocation2 + $0x1a8] sm:$0xff]
    %v480 = vld [vmem:[#allocation2 + $0x1b0] sm:$0xff]
    %v481 = vld [vmem:[#allocation2 + $0x1b8] sm:$0xff]
    %v482 = vld [vmem:[#allocation2 + $0x1c0] sm:$0xff]
    %v483 = vld [vmem:[#allocation2 + $0x1c8] sm:$0xff]
    %v484 = vld [vmem:[#allocation2 + $0x1d0] sm:$0xff]
    %v485 = vld [vmem:[#allocation2 + $0x1d8] sm:$0xff]
    %v486 = vld [vmem:[#allocation2 + $0x1e0] sm:$0xff]
    %v487 = vld [vmem:[#allocation2 + $0x1e8] sm:$0xff]
    %v488 = vld [vmem:[#allocation2 + $0x1f0] sm:$0xff]
    %v489 = vld [vmem:[#allocation2 + $0x1f8] sm:$0xff]
    %v490 = vld [vmem:[#allocation2 + $0x200] sm:$0xff]
    %v491 = vld [vmem:[#allocation2 + $0x208] sm:$0xff]
    %v492 = vld [vmem:[#allocation2 + $0x210] sm:$0xff]
    %v493 = vld [vmem:[#allocation2 + $0x218] sm:$0xff]
    %v494 = vld [vmem:[#allocation2 + $0x220] sm:$0xff]
    %v495 = vld [vmem:[#allocation2 + $0x228] sm:$0xff]
    %v496 = vld [vmem:[#allocation2 + $0x230] sm:$0xff]
    %v497 = vld [vmem:[#allocation2 + $0x238] sm:$0xff]
    %v498 = vld [vmem:[#allocation2 + $0x240] sm:$0xff]
    %v499 = vld [vmem:[#allocation2 + $0x248] sm:$0xff]
    %v500 = vld [vmem:[#allocation2 + $0x250] sm:$0xff]
    %v501 = vld [vmem:[#allocation2 + $0x258] sm:$0xff]
    %v502 = vld [vmem:[#allocation2 + $0x260] sm:$0xff]
    %v503 = vld [vmem:[#allocation2 + $0x268] sm:$0xff]
    %v504 = vld [vmem:[#allocation2 + $0x270] sm:$0xff]
    %v505 = vld [vmem:[#allocation2 + $0x278] sm:$0xff]
    %v506 = vld [vmem:[#allocation2 + $0x280] sm:$0xff]
    %v507 = vld [vmem:[#allocation2 + $0x288] sm:$0xff]
    %v508 = vld [vmem:[#allocation2 + $0x290] sm:$0xff]
    %v509 = vld [vmem:[#allocation2 + $0x298] sm:$0xff]
    %v510 = vld [vmem:[#allocation2 + $0x2a0] sm:$0xff]
    %v511 = vld [vmem:[#allocation2 + $0x2a8] sm:$0xff]
    %v512 = vld [vmem:[#allocation2 + $0x2b0] sm:$0xff]
    %v513 = vld [vmem:[#allocation2 + $0x2b8] sm:$0xff]
    %v514 = vld [vmem:[#allocation2 + $0x2c0] sm:$0xff]
    %v515 = vld [vmem:[#allocation2 + $0x2c8] sm:$0xff]
    %v516 = vld [vmem:[#allocation2 + $0x2d0] sm:$0xff]
    %v517 = vld [vmem:[#allocation2 + $0x2d8] sm:$0xff]
    %v518 = vld [vmem:[#allocation2 + $0x2e0] sm:$0xff]
    %v519 = vld [vmem:[#allocation2 + $0x2e8] sm:$0xff]
    %v520 = vld [vmem:[#allocation2 + $0x2f0] sm:$0xff]
    %v521 = vld [vmem:[#allocation2 + $0x2f8] sm:$0xff]
    %v522 = vld [vmem:[#allocation2 + $0x300] sm:$0xff]
    %v523 = vld [vmem:[#allocation2 + $0x308] sm:$0xff]
    %v524 = vld [vmem:[#allocation2 + $0x310] sm:$0xff]
    %v525 = vld [vmem:[#allocation2 + $0x318] sm:$0xff]
    %v526 = vld [vmem:[#allocation2 + $0x320] sm:$0xff]
    %v527 = vld [vmem:[#allocation2 + $0x328] sm:$0xff]
    %v528 = vld [vmem:[#allocation2 + $0x330] sm:$0xff]
    %v529 = vld [vmem:[#allocation2 + $0x338] sm:$0xff]
    %v530 = vld [vmem:[#allocation2 + $0x340] sm:$0xff]
    %v531 = vld [vmem:[#allocation2 + $0x348] sm:$0xff]
    %v532 = vld [vmem:[#allocation2 + $0x350] sm:$0xff]
    %v533 = vld [vmem:[#allocation2 + $0x358] sm:$0xff]
    %v534 = vld [vmem:[#allocation2 + $0x360] sm:$0xff]
    %v535 = vld [vmem:[#allocation2 + $0x368] sm:$0xff]
    %v536 = vld [vmem:[#allocation2 + $0x370] sm:$0xff]
    %v537 = vld [vmem:[#allocation2 + $0x378] sm:$0xff]
    %v538 = vld [vmem:[#allocation2 + $0x380] sm:$0xff]
    %v539 = vld [vmem:[#allocation2 + $0x388] sm:$0xff]
    %v540 = vld [vmem:[#allocation2 + $0x390] sm:$0xff]
    %v541 = vld [vmem:[#allocation2 + $0x398] sm:$0xff]
    %v542 = vld [vmem:[#allocation2 + $0x3a0] sm:$0xff]
    %v543 = vld [vmem:[#allocation2 + $0x3a8] sm:$0xff]
    %v544 = vld [vmem:[#allocation2 + $0x3b0] sm:$0xff]
    %v545 = vld [vmem:[#allocation2 + $0x3b8] sm:$0xff]
    %v546 = vld [vmem:[#allocation2 + $0x3c0] sm:$0xff]
    %v547 = vld [vmem:[#allocation2 + $0x3c8] sm:$0xff]
    %v548 = vld [vmem:[#allocation2 + $0x3d0] sm:$0xff]
    %v549 = vld [vmem:[#allocation2 + $0x3d8] sm:$0xff]
    %v550 = vld [vmem:[#allocation2 + $0x3e0] sm:$0xff]
    %v551 = vld [vmem:[#allocation2 + $0x3e8] sm:$0xff]
    %v552 = vld [vmem:[#allocation2 + $0x3f0] sm:$0xff]
    %v553 = vld [vmem:[#allocation2 + $0x3f8] sm:$0xff]
    %v554 = vld [vmem:[%s4] sm:$0xf]
    %v556 = vlaneseq
    %v557 = vshrl.u32 %v556, 7
    %v558 = vsub.s32 0, %v557
    %v559 = vrot.slane %v554, %v558
    %v560 = vlaneseq
    %v561 = vshrl.u32 %v560, 7
    %v562 = vsub.s32 1, %v561
    %v563 = vrot.slane %v554, %v562
    %v564 = vlaneseq
    %v565 = vshrl.u32 %v564, 7
    %v566 = vsub.s32 2, %v565
    %v567 = vrot.slane %v554, %v566
    %v568 = vlaneseq
    %v569 = vshrl.u32 %v568, 7
    %v570 = vsub.s32 3, %v569
    %v571 = vrot.slane %v554, %v570
    %v704 = vunpack.c.l.b16 %v426
    %v705 = vunpack.c.h.b16 %v426
    %v706 = vunpack.c.l.b16 %v427
    %v707 = vunpack.c.h.b16 %v427
    %v708 = vunpack.c.l.b16 %v428
    %v709 = vunpack.c.h.b16 %v428
    %v710 = vunpack.c.l.b16 %v429
    %v711 = vunpack.c.h.b16 %v429
    %v712 = vunpack.c.l.b16 %v430
    %v713 = vunpack.c.h.b16 %v430
    %v714 = vunpack.c.l.b16 %v431
    %v715 = vunpack.c.h.b16 %v431
    %v716 = vunpack.c.l.b16 %v432
    %v717 = vunpack.c.h.b16 %v432
    %v718 = vunpack.c.l.b16 %v433
    %v719 = vunpack.c.h.b16 %v433
    %v720 = vunpack.c.l.b16 %v434
    %v721 = vunpack.c.h.b16 %v434
    %v722 = vunpack.c.l.b16 %v435
    %v723 = vunpack.c.h.b16 %v435
    %v724 = vunpack.c.l.b16 %v436
    %v725 = vunpack.c.h.b16 %v436
    %v726 = vunpack.c.l.b16 %v437
    %v727 = vunpack.c.h.b16 %v437
    %v728 = vunpack.c.l.b16 %v438
    %v729 = vunpack.c.h.b16 %v438
    %v730 = vunpack.c.l.b16 %v439
    %v731 = vunpack.c.h.b16 %v439
    %v732 = vunpack.c.l.b16 %v440
    %v733 = vunpack.c.h.b16 %v440
    %v734 = vunpack.c.l.b16 %v441
    %v735 = vunpack.c.h.b16 %v441
    %v736 = vunpack.c.l.b16 %v442
    %v737 = vunpack.c.h.b16 %v442
    %v738 = vunpack.c.l.b16 %v443
    %v739 = vunpack.c.h.b16 %v443
    %v740 = vunpack.c.l.b16 %v444
    %v741 = vunpack.c.h.b16 %v444
    %v742 = vunpack.c.l.b16 %v445
    %v743 = vunpack.c.h.b16 %v445
    %v744 = vunpack.c.l.b16 %v446
    %v745 = vunpack.c.h.b16 %v446
    %v746 = vunpack.c.l.b16 %v447
    %v747 = vunpack.c.h.b16 %v447
    %v748 = vunpack.c.l.b16 %v448
    %v749 = vunpack.c.h.b16 %v448
    %v750 = vunpack.c.l.b16 %v449
    %v751 = vunpack.c.h.b16 %v449
    %v752 = vunpack.c.l.b16 %v450
    %v753 = vunpack.c.h.b16 %v450
    %v754 = vunpack.c.l.b16 %v451
    %v755 = vunpack.c.h.b16 %v451
    %v756 = vunpack.c.l.b16 %v452
    %v757 = vunpack.c.h.b16 %v452
    %v758 = vunpack.c.l.b16 %v453
    %v759 = vunpack.c.h.b16 %v453
    %v760 = vunpack.c.l.b16 %v454
    %v761 = vunpack.c.h.b16 %v454
    %v762 = vunpack.c.l.b16 %v455
    %v763 = vunpack.c.h.b16 %v455
    %v764 = vunpack.c.l.b16 %v456
    %v765 = vunpack.c.h.b16 %v456
    %v766 = vunpack.c.l.b16 %v457
    %v767 = vunpack.c.h.b16 %v457
    %v768 = vunpack.c.l.b16 %v458
    %v769 = vunpack.c.h.b16 %v458
    %v770 = vunpack.c.l.b16 %v459
    %v771 = vunpack.c.h.b16 %v459
    %v772 = vunpack.c.l.b16 %v460
    %v773 = vunpack.c.h.b16 %v460
    %v774 = vunpack.c.l.b16 %v461
    %v775 = vunpack.c.h.b16 %v461
    %v776 = vunpack.c.l.b16 %v462
    %v777 = vunpack.c.h.b16 %v462
    %v778 = vunpack.c.l.b16 %v463
    %v779 = vunpack.c.h.b16 %v463
    %v780 = vunpack.c.l.b16 %v464
    %v781 = vunpack.c.h.b16 %v464
    %v782 = vunpack.c.l.b16 %v465
    %v783 = vunpack.c.h.b16 %v465
    %v784 = vunpack.c.l.b16 %v466
    %v785 = vunpack.c.h.b16 %v466
    %v786 = vunpack.c.l.b16 %v467
    %v787 = vunpack.c.h.b16 %v467
    %v788 = vunpack.c.l.b16 %v468
    %v789 = vunpack.c.h.b16 %v468
    %v790 = vunpack.c.l.b16 %v469
    %v791 = vunpack.c.h.b16 %v469
    %v792 = vunpack.c.l.b16 %v470
    %v793 = vunpack.c.h.b16 %v470
    %v794 = vunpack.c.l.b16 %v471
    %v795 = vunpack.c.h.b16 %v471
    %v796 = vunpack.c.l.b16 %v472
    %v797 = vunpack.c.h.b16 %v472
    %v798 = vunpack.c.l.b16 %v473
    %v799 = vunpack.c.h.b16 %v473
    %v800 = vunpack.c.l.b16 %v474
    %v801 = vunpack.c.h.b16 %v474
    %v802 = vunpack.c.l.b16 %v475
    %v803 = vunpack.c.h.b16 %v475
    %v804 = vunpack.c.l.b16 %v476
    %v805 = vunpack.c.h.b16 %v476
    %v806 = vunpack.c.l.b16 %v477
    %v807 = vunpack.c.h.b16 %v477
    %v808 = vunpack.c.l.b16 %v478
    %v809 = vunpack.c.h.b16 %v478
    %v810 = vunpack.c.l.b16 %v479
    %v811 = vunpack.c.h.b16 %v479
    %v812 = vunpack.c.l.b16 %v480
    %v813 = vunpack.c.h.b16 %v480
    %v814 = vunpack.c.l.b16 %v481
    %v815 = vunpack.c.h.b16 %v481
    %v816 = vunpack.c.l.b16 %v482
    %v817 = vunpack.c.h.b16 %v482
    %v818 = vunpack.c.l.b16 %v483
    %v819 = vunpack.c.h.b16 %v483
    %v820 = vunpack.c.l.b16 %v484
    %v821 = vunpack.c.h.b16 %v484
    %v822 = vunpack.c.l.b16 %v485
    %v823 = vunpack.c.h.b16 %v485
    %v824 = vunpack.c.l.b16 %v486
    %v825 = vunpack.c.h.b16 %v486
    %v826 = vunpack.c.l.b16 %v487
    %v827 = vunpack.c.h.b16 %v487
    %v828 = vunpack.c.l.b16 %v488
    %v829 = vunpack.c.h.b16 %v488
    %v830 = vunpack.c.l.b16 %v489
    %v831 = vunpack.c.h.b16 %v489
    %v832 = vunpack.c.l.b16 %v490
    %v833 = vunpack.c.h.b16 %v490
    %v834 = vunpack.c.l.b16 %v491
    %v835 = vunpack.c.h.b16 %v491
    %v836 = vunpack.c.l.b16 %v492
    %v837 = vunpack.c.h.b16 %v492
    %v838 = vunpack.c.l.b16 %v493
    %v839 = vunpack.c.h.b16 %v493
    %v840 = vunpack.c.l.b16 %v494
    %v841 = vunpack.c.h.b16 %v494
    %v842 = vunpack.c.l.b16 %v495
    %v843 = vunpack.c.h.b16 %v495
    %v844 = vunpack.c.l.b16 %v496
    %v845 = vunpack.c.h.b16 %v496
    %v846 = vunpack.c.l.b16 %v497
    %v847 = vunpack.c.h.b16 %v497
    %v848 = vunpack.c.l.b16 %v498
    %v849 = vunpack.c.h.b16 %v498
    %v850 = vunpack.c.l.b16 %v499
    %v851 = vunpack.c.h.b16 %v499
    %v852 = vunpack.c.l.b16 %v500
    %v853 = vunpack.c.h.b16 %v500
    %v854 = vunpack.c.l.b16 %v501
    %v855 = vunpack.c.h.b16 %v501
    %v856 = vunpack.c.l.b16 %v502
    %v857 = vunpack.c.h.b16 %v502
    %v858 = vunpack.c.l.b16 %v503
    %v859 = vunpack.c.h.b16 %v503
    %v860 = vunpack.c.l.b16 %v504
    %v861 = vunpack.c.h.b16 %v504
    %v862 = vunpack.c.l.b16 %v505
    %v863 = vunpack.c.h.b16 %v505
    %v864 = vunpack.c.l.b16 %v506
    %v865 = vunpack.c.h.b16 %v506
    %v866 = vunpack.c.l.b16 %v507
    %v867 = vunpack.c.h.b16 %v507
    %v868 = vunpack.c.l.b16 %v508
    %v869 = vunpack.c.h.b16 %v508
    %v870 = vunpack.c.l.b16 %v509
    %v871 = vunpack.c.h.b16 %v509
    %v872 = vunpack.c.l.b16 %v510
    %v873 = vunpack.c.h.b16 %v510
    %v874 = vunpack.c.l.b16 %v511
    %v875 = vunpack.c.h.b16 %v511
    %v876 = vunpack.c.l.b16 %v512
    %v877 = vunpack.c.h.b16 %v512
    %v878 = vunpack.c.l.b16 %v513
    %v879 = vunpack.c.h.b16 %v513
    %v880 = vunpack.c.l.b16 %v514
    %v881 = vunpack.c.h.b16 %v514
    %v882 = vunpack.c.l.b16 %v515
    %v883 = vunpack.c.h.b16 %v515
    %v884 = vunpack.c.l.b16 %v516
    %v885 = vunpack.c.h.b16 %v516
    %v886 = vunpack.c.l.b16 %v517
    %v887 = vunpack.c.h.b16 %v517
    %v888 = vunpack.c.l.b16 %v518
    %v889 = vunpack.c.h.b16 %v518
    %v890 = vunpack.c.l.b16 %v519
    %v891 = vunpack.c.h.b16 %v519
    %v892 = vunpack.c.l.b16 %v520
    %v893 = vunpack.c.h.b16 %v520
    %v894 = vunpack.c.l.b16 %v521
    %v895 = vunpack.c.h.b16 %v521
    %v896 = vunpack.c.l.b16 %v522
    %v897 = vunpack.c.h.b16 %v522
    %v898 = vunpack.c.l.b16 %v523
    %v899 = vunpack.c.h.b16 %v523
    %v900 = vunpack.c.l.b16 %v524
    %v901 = vunpack.c.h.b16 %v524
    %v902 = vunpack.c.l.b16 %v525
    %v903 = vunpack.c.h.b16 %v525
    %v904 = vunpack.c.l.b16 %v526
    %v905 = vunpack.c.h.b16 %v526
    %v906 = vunpack.c.l.b16 %v527
    %v907 = vunpack.c.h.b16 %v527
    %v908 = vunpack.c.l.b16 %v528
    %v909 = vunpack.c.h.b16 %v528
    %v910 = vunpack.c.l.b16 %v529
    %v911 = vunpack.c.h.b16 %v529
    %v912 = vunpack.c.l.b16 %v530
    %v913 = vunpack.c.h.b16 %v530
    %v914 = vunpack.c.l.b16 %v531
    %v915 = vunpack.c.h.b16 %v531
    %v916 = vunpack.c.l.b16 %v532
    %v917 = vunpack.c.h.b16 %v532
    %v918 = vunpack.c.l.b16 %v533
    %v919 = vunpack.c.h.b16 %v533
    %v920 = vunpack.c.l.b16 %v534
    %v921 = vunpack.c.h.b16 %v534
    %v922 = vunpack.c.l.b16 %v535
    %v923 = vunpack.c.h.b16 %v535
    %v924 = vunpack.c.l.b16 %v536
    %v925 = vunpack.c.h.b16 %v536
    %v926 = vunpack.c.l.b16 %v537
    %v927 = vunpack.c.h.b16 %v537
    %v928 = vunpack.c.l.b16 %v538
    %v929 = vunpack.c.h.b16 %v538
    %v930 = vunpack.c.l.b16 %v539
    %v931 = vunpack.c.h.b16 %v539
    %v932 = vunpack.c.l.b16 %v540
    %v933 = vunpack.c.h.b16 %v540
    %v934 = vunpack.c.l.b16 %v541
    %v935 = vunpack.c.h.b16 %v541
    %v936 = vunpack.c.l.b16 %v542
    %v937 = vunpack.c.h.b16 %v542
    %v938 = vunpack.c.l.b16 %v543
    %v939 = vunpack.c.h.b16 %v543
    %v940 = vunpack.c.l.b16 %v544
    %v941 = vunpack.c.h.b16 %v544
    %v942 = vunpack.c.l.b16 %v545
    %v943 = vunpack.c.h.b16 %v545
    %v944 = vunpack.c.l.b16 %v546
    %v945 = vunpack.c.h.b16 %v546
    %v946 = vunpack.c.l.b16 %v547
    %v947 = vunpack.c.h.b16 %v547
    %v948 = vunpack.c.l.b16 %v548
    %v949 = vunpack.c.h.b16 %v548
    %v950 = vunpack.c.l.b16 %v549
    %v951 = vunpack.c.h.b16 %v549
    %v952 = vunpack.c.l.b16 %v550
    %v953 = vunpack.c.h.b16 %v550
    %v954 = vunpack.c.l.b16 %v551
    %v955 = vunpack.c.h.b16 %v551
    %v956 = vunpack.c.l.b16 %v552
    %v957 = vunpack.c.h.b16 %v552
    %v958 = vunpack.c.l.b16 %v553
    %v959 = vunpack.c.h.b16 %v553
    %v960 = vpack.c.b16 %v708, %v704
    %v961 = vpack.c.b16 %v709, %v705
    %v962 = vpack.c.b16 %v710, %v706
    %v963 = vpack.c.b16 %v711, %v707
    %v964 = vpack.c.b16 %v716, %v712
    %v965 = vpack.c.b16 %v717, %v713
    %v966 = vpack.c.b16 %v718, %v714
    %v967 = vpack.c.b16 %v719, %v715
    %v968 = vpack.c.b16 %v724, %v720
    %v969 = vpack.c.b16 %v725, %v721
    %v970 = vpack.c.b16 %v726, %v722
    %v971 = vpack.c.b16 %v727, %v723
    %v972 = vpack.c.b16 %v732, %v728
    %v973 = vpack.c.b16 %v733, %v729
    %v974 = vpack.c.b16 %v734, %v730
    %v975 = vpack.c.b16 %v735, %v731
    %v976 = vpack.c.b16 %v740, %v736
    %v977 = vpack.c.b16 %v741, %v737
    %v978 = vpack.c.b16 %v742, %v738
    %v979 = vpack.c.b16 %v743, %v739
    %v980 = vpack.c.b16 %v748, %v744
    %v981 = vpack.c.b16 %v749, %v745
    %v982 = vpack.c.b16 %v750, %v746
    %v983 = vpack.c.b16 %v751, %v747
    %v984 = vpack.c.b16 %v756, %v752
    %v985 = vpack.c.b16 %v757, %v753
    %v986 = vpack.c.b16 %v758, %v754
    %v987 = vpack.c.b16 %v759, %v755
    %v988 = vpack.c.b16 %v764, %v760
    %v989 = vpack.c.b16 %v765, %v761
    %v990 = vpack.c.b16 %v766, %v762
    %v991 = vpack.c.b16 %v767, %v763
    %v992 = vpack.c.b16 %v772, %v768
    %v993 = vpack.c.b16 %v773, %v769
    %v994 = vpack.c.b16 %v774, %v770
    %v995 = vpack.c.b16 %v775, %v771
    %v996 = vpack.c.b16 %v780, %v776
    %v997 = vpack.c.b16 %v781, %v777
    %v998 = vpack.c.b16 %v782, %v778
    %v999 = vpack.c.b16 %v783, %v779
    %v1000 = vpack.c.b16 %v788, %v784
    %v1001 = vpack.c.b16 %v789, %v785
    %v1002 = vpack.c.b16 %v790, %v786
    %v1003 = vpack.c.b16 %v791, %v787
    %v1004 = vpack.c.b16 %v796, %v792
    %v1005 = vpack.c.b16 %v797, %v793
    %v1006 = vpack.c.b16 %v798, %v794
    %v1007 = vpack.c.b16 %v799, %v795
    %v1008 = vpack.c.b16 %v804, %v800
    %v1009 = vpack.c.b16 %v805, %v801
    %v1010 = vpack.c.b16 %v806, %v802
    %v1011 = vpack.c.b16 %v807, %v803
    %v1012 = vpack.c.b16 %v812, %v808
    %v1013 = vpack.c.b16 %v813, %v809
    %v1014 = vpack.c.b16 %v814, %v810
    %v1015 = vpack.c.b16 %v815, %v811
    %v1016 = vpack.c.b16 %v820, %v816
    %v1017 = vpack.c.b16 %v821, %v817
    %v1018 = vpack.c.b16 %v822, %v818
    %v1019 = vpack.c.b16 %v823, %v819
    %v1020 = vpack.c.b16 %v828, %v824
    %v1021 = vpack.c.b16 %v829, %v825
    %v1022 = vpack.c.b16 %v830, %v826
    %v1023 = vpack.c.b16 %v831, %v827
    %v1024 = vpack.c.b16 %v836, %v832
    %v1025 = vpack.c.b16 %v837, %v833
    %v1026 = vpack.c.b16 %v838, %v834
    %v1027 = vpack.c.b16 %v839, %v835
    %v1028 = vpack.c.b16 %v844, %v840
    %v1029 = vpack.c.b16 %v845, %v841
    %v1030 = vpack.c.b16 %v846, %v842
    %v1031 = vpack.c.b16 %v847, %v843
    %v1032 = vpack.c.b16 %v852, %v848
    %v1033 = vpack.c.b16 %v853, %v849
    %v1034 = vpack.c.b16 %v854, %v850
    %v1035 = vpack.c.b16 %v855, %v851
    %v1036 = vpack.c.b16 %v860, %v856
    %v1037 = vpack.c.b16 %v861, %v857
    %v1038 = vpack.c.b16 %v862, %v858
    %v1039 = vpack.c.b16 %v863, %v859
    %v1040 = vpack.c.b16 %v868, %v864
    %v1041 = vpack.c.b16 %v869, %v865
    %v1042 = vpack.c.b16 %v870, %v866
    %v1043 = vpack.c.b16 %v871, %v867
    %v1044 = vpack.c.b16 %v876, %v872
    %v1045 = vpack.c.b16 %v877, %v873
    %v1046 = vpack.c.b16 %v878, %v874
    %v1047 = vpack.c.b16 %v879, %v875
    %v1048 = vpack.c.b16 %v884, %v880
    %v1049 = vpack.c.b16 %v885, %v881
    %v1050 = vpack.c.b16 %v886, %v882
    %v1051 = vpack.c.b16 %v887, %v883
    %v1052 = vpack.c.b16 %v892, %v888
    %v1053 = vpack.c.b16 %v893, %v889
    %v1054 = vpack.c.b16 %v894, %v890
    %v1055 = vpack.c.b16 %v895, %v891
    %v1056 = vpack.c.b16 %v900, %v896
    %v1057 = vpack.c.b16 %v901, %v897
    %v1058 = vpack.c.b16 %v902, %v898
    %v1059 = vpack.c.b16 %v903, %v899
    %v1060 = vpack.c.b16 %v908, %v904
    %v1061 = vpack.c.b16 %v909, %v905
    %v1062 = vpack.c.b16 %v910, %v906
    %v1063 = vpack.c.b16 %v911, %v907
    %v1064 = vpack.c.b16 %v916, %v912
    %v1065 = vpack.c.b16 %v917, %v913
    %v1066 = vpack.c.b16 %v918, %v914
    %v1067 = vpack.c.b16 %v919, %v915
    %v1068 = vpack.c.b16 %v924, %v920
    %v1069 = vpack.c.b16 %v925, %v921
    %v1070 = vpack.c.b16 %v926, %v922
    %v1071 = vpack.c.b16 %v927, %v923
    %v1072 = vpack.c.b16 %v932, %v928
    %v1073 = vpack.c.b16 %v933, %v929
    %v1074 = vpack.c.b16 %v934, %v930
    %v1075 = vpack.c.b16 %v935, %v931
    %v1076 = vpack.c.b16 %v940, %v936
    %v1077 = vpack.c.b16 %v941, %v937
    %v1078 = vpack.c.b16 %v942, %v938
    %v1079 = vpack.c.b16 %v943, %v939
    %v1080 = vpack.c.b16 %v948, %v944
    %v1081 = vpack.c.b16 %v949, %v945
    %v1082 = vpack.c.b16 %v950, %v946
    %v1083 = vpack.c.b16 %v951, %v947
    %v1084 = vpack.c.b16 %v956, %v952
    %v1085 = vpack.c.b16 %v957, %v953
    %v1086 = vpack.c.b16 %v958, %v954
    %v1087 = vpack.c.b16 %v959, %v955
    %1216 = vmatprep.subr.bf16.mxu0 %v961
    %1217 = vmatpush1.bf16.msra.mxu0 %v960
    %1218 = vmatprep.subr.bf16.mxu0 %v965
    %1219 = vmatpush1.bf16.msra.mxu0 %v964
    %1220 = vmatprep.subr.bf16.mxu0 %v969
    %1221 = vmatpush1.bf16.msra.mxu0 %v968
    %1222 = vmatprep.subr.bf16.mxu0 %v973
    %1223 = vmatpush1.bf16.msra.mxu0 %v972
    %1224 = vmatprep.subr.bf16.mxu0 %v977
    %1225 = vmatpush1.bf16.msra.mxu0 %v976
    %1226 = vmatprep.subr.bf16.mxu0 %v981
    %1227 = vmatpush1.bf16.msra.mxu0 %v980
    %1228 = vmatprep.subr.bf16.mxu0 %v985
    %1229 = vmatpush1.bf16.msra.mxu0 %v984
    %1230 = vmatprep.subr.bf16.mxu0 %v989
    %1231 = vmatpush1.bf16.msra.mxu0 %v988
    %1232 = vmatprep.subr.bf16.mxu0 %v993
    %1233 = vmatpush1.bf16.msra.mxu0 %v992
    %1234 = vmatprep.subr.bf16.mxu0 %v997
    %1235 = vmatpush1.bf16.msra.mxu0 %v996
    %1236 = vmatprep.subr.bf16.mxu0 %v1001
    %1237 = vmatpush1.bf16.msra.mxu0 %v1000
    %1238 = vmatprep.subr.bf16.mxu0 %v1005
    %1239 = vmatpush1.bf16.msra.mxu0 %v1004
    %1240 = vmatprep.subr.bf16.mxu0 %v1009
    %1241 = vmatpush1.bf16.msra.mxu0 %v1008
    %1242 = vmatprep.subr.bf16.mxu0 %v1013
    %1243 = vmatpush1.bf16.msra.mxu0 %v1012
    %1244 = vmatprep.subr.bf16.mxu0 %v1017
    %1245 = vmatpush1.bf16.msra.mxu0 %v1016
    %1246 = vmatprep.subr.bf16.mxu0 %v1021
    %1247 = vmatpush1.bf16.msra.mxu0 %v1020
    %1248 = vmatprep.mubr.bf16.mxu0 %v411
    %1249 = vmatmul.mubr.bf16.gmra.mrb[0].mxu0 %v410
    %v1250 = vpop.f32.mrb[0].mxu0
    %v1251 = vadd.f32 %v559, %v1250
    %v1252 = vpop.f32.mrb[0].mxu0
    %v1253 = vadd.f32 %v563, %v1252
    %v1254 = vpop.f32.mrb[0].mxu0
    %v1255 = vadd.f32 %v559, %v1254
    %v1256 = vpop.f32.mrb[0].mxu0
    %v1257 = vadd.f32 %v563, %v1256
    %1258 = vmatprep.mubr.bf16.mxu0 %v415
    %1259 = vmatmul.mubr.bf16.gmra.mrb[0].mxu0 %v414
    %v1260 = vpop.f32.mrb[0].mxu0
    %v1261 = vadd.f32 %v559, %v1260
    %v1262 = vpop.f32.mrb[0].mxu0
    %v1263 = vadd.f32 %v563, %v1262
    %v1264 = vpop.f32.mrb[0].mxu0
    %v1265 = vadd.f32 %v559, %v1264
    %v1266 = vpop.f32.mrb[0].mxu0
    %v1267 = vadd.f32 %v563, %v1266
    %1268 = vmatprep.mubr.bf16.mxu0 %v419
    %1269 = vmatmul.mubr.bf16.gmra.mrb[0].mxu0 %v418
    %v1270 = vpop.f32.mrb[0].mxu0
    %v1271 = vadd.f32 %v559, %v1270
    %v1272 = vpop.f32.mrb[0].mxu0
    %v1273 = vadd.f32 %v563, %v1272
    %v1274 = vpop.f32.mrb[0].mxu0
    %v1275 = vadd.f32 %v559, %v1274
    %v1276 = vpop.f32.mrb[0].mxu0
    %v1277 = vadd.f32 %v563, %v1276
    %1278 = vmatprep.mubr.bf16.mxu0 %v423
    %1279 = vmatmul.mubr.bf16.gmra.mrb[0].mxu0 %v422
    %v1280 = vpop.f32.mrb[0].mxu0
    %v1281 = vadd.f32 %v559, %v1280
    %v1282 = vpop.f32.mrb[0].mxu0
    %v1283 = vadd.f32 %v563, %v1282
    %v1284 = vpop.f32.mrb[0].mxu0
    %v1285 = vadd.f32 %v559, %v1284
    %v1286 = vpop.f32.mrb[0].mxu0
    %v1287 = vadd.f32 %v563, %v1286
    %1288 = vdwg.mxu0
    %1289 = vmatprep.subr.bf16.mxu0 %v1025
    %1290 = vmatpush1.bf16.msra.mxu0 %v1024
    %1291 = vmatprep.subr.bf16.mxu0 %v1029
    %1292 = vmatpush1.bf16.msra.mxu0 %v1028
    %1293 = vmatprep.subr.bf16.mxu0 %v1033
    %1294 = vmatpush1.bf16.msra.mxu0 %v1032
    %1295 = vmatprep.subr.bf16.mxu0 %v1037
    %1296 = vmatpush1.bf16.msra.mxu0 %v1036
    %1297 = vmatprep.subr.bf16.mxu0 %v1041
    %1298 = vmatpush1.bf16.msra.mxu0 %v1040
    %1299 = vmatprep.subr.bf16.mxu0 %v1045
    %1300 = vmatpush1.bf16.msra.mxu0 %v1044
    %1301 = vmatprep.subr.bf16.mxu0 %v1049
    %1302 = vmatpush1.bf16.msra.mxu0 %v1048
    %1303 = vmatprep.subr.bf16.mxu0 %v1053
    %1304 = vmatpush1.bf16.msra.mxu0 %v1052
    %1305 = vmatprep.subr.bf16.mxu0 %v1057
    %1306 = vmatpush1.bf16.msra.mxu0 %v1056
    %1307 = vmatprep.subr.bf16.mxu0 %v1061
    %1308 = vmatpush1.bf16.msra.mxu0 %v1060
    %1309 = vmatprep.subr.bf16.mxu0 %v1065
    %1310 = vmatpush1.bf16.msra.mxu0 %v1064
    %1311 = vmatprep.subr.bf16.mxu0 %v1069
    %1312 = vmatpush1.bf16.msra.mxu0 %v1068
    %1313 = vmatprep.subr.bf16.mxu0 %v1073
    %1314 = vmatpush1.bf16.msra.mxu0 %v1072
    %1315 = vmatprep.subr.bf16.mxu0 %v1077
    %1316 = vmatpush1.bf16.msra.mxu0 %v1076
    %1317 = vmatprep.subr.bf16.mxu0 %v1081
    %1318 = vmatpush1.bf16.msra.mxu0 %v1080
    %1319 = vmatprep.subr.bf16.mxu0 %v1085
    %1320 = vmatpush1.bf16.msra.mxu0 %v1084
    %1321 = vmatprep.mubr.bf16.mxu0 %v413
    %1322 = vmatmul.mubr.bf16.gmra.mrb[0].mxu0 %v412
    %v1323 = vpop.f32.mrb[0].mxu0
    %v1324 = vadd.f32 %v1251, %v1323
    %v1325 = vpop.f32.mrb[0].mxu0
    %v1326 = vadd.f32 %v1253, %v1325
    %v1327 = vpop.f32.mrb[0].mxu0
    %v1328 = vadd.f32 %v1255, %v1327
    %v1329 = vpop.f32.mrb[0].mxu0
    %v1330 = vadd.f32 %v1257, %v1329
    %1331 = vmatprep.mubr.bf16.mxu0 %v417
    %1332 = vmatmul.mubr.bf16.gmra.mrb[0].mxu0 %v416
    %v1333 = vpop.f32.mrb[0].mxu0
    %v1334 = vadd.f32 %v1261, %v1333
    %v1335 = vpop.f32.mrb[0].mxu0
    %v1336 = vadd.f32 %v1263, %v1335
    %v1337 = vpop.f32.mrb[0].mxu0
    %v1338 = vadd.f32 %v1265, %v1337
    %v1339 = vpop.f32.mrb[0].mxu0
    %v1340 = vadd.f32 %v1267, %v1339
    %1341 = vmatprep.mubr.bf16.mxu0 %v421
    %1342 = vmatmul.mubr.bf16.gmra.mrb[0].mxu0 %v420
    %v1343 = vpop.f32.mrb[0].mxu0
    %v1344 = vadd.f32 %v1271, %v1343
    %v1345 = vpop.f32.mrb[0].mxu0
    %v1346 = vadd.f32 %v1273, %v1345
    %v1347 = vpop.f32.mrb[0].mxu0
    %v1348 = vadd.f32 %v1275, %v1347
    %v1349 = vpop.f32.mrb[0].mxu0
    %v1350 = vadd.f32 %v1277, %v1349
    %1351 = vmatprep.mubr.bf16.mxu0 %v425
    %1352 = vmatmul.mubr.bf16.gmra.mrb[0].mxu0 %v424
    %v1353 = vpop.f32.mrb[0].mxu0
    %v1354 = vadd.f32 %v1281, %v1353
    %v1355 = vpop.f32.mrb[0].mxu0
    %v1356 = vadd.f32 %v1283, %v1355
    %v1357 = vpop.f32.mrb[0].mxu0
    %v1358 = vadd.f32 %v1285, %v1357
    %v1359 = vpop.f32.mrb[0].mxu0
    %v1360 = vadd.f32 %v1287, %v1359
    %1361 = vdwg.mxu0
    %1362 = vmatprep.subr.bf16.mxu0 %v963
    %1363 = vmatpush1.bf16.msra.mxu0 %v962
    %1364 = vmatprep.subr.bf16.mxu0 %v967
    %1365 = vmatpush1.bf16.msra.mxu0 %v966
    %1366 = vmatprep.subr.bf16.mxu0 %v971
    %1367 = vmatpush1.bf16.msra.mxu0 %v970
    %1368 = vmatprep.subr.bf16.mxu0 %v975
    %1369 = vmatpush1.bf16.msra.mxu0 %v974
    %1370 = vmatprep.subr.bf16.mxu0 %v979
    %1371 = vmatpush1.bf16.msra.mxu0 %v978
    %1372 = vmatprep.subr.bf16.mxu0 %v983
    %1373 = vmatpush1.bf16.msra.mxu0 %v982
    %1374 = vmatprep.subr.bf16.mxu0 %v987
    %1375 = vmatpush1.bf16.msra.mxu0 %v986
    %1376 = vmatprep.subr.bf16.mxu0 %v991
    %1377 = vmatpush1.bf16.msra.mxu0 %v990
    %1378 = vmatprep.subr.bf16.mxu0 %v995
    %1379 = vmatpush1.bf16.msra.mxu0 %v994
    %1380 = vmatprep.subr.bf16.mxu0 %v999
    %1381 = vmatpush1.bf16.msra.mxu0 %v998
    %1382 = vmatprep.subr.bf16.mxu0 %v1003
    %1383 = vmatpush1.bf16.msra.mxu0 %v1002
    %1384 = vmatprep.subr.bf16.mxu0 %v1007
    %1385 = vmatpush1.bf16.msra.mxu0 %v1006
    %1386 = vmatprep.subr.bf16.mxu0 %v1011
    %1387 = vmatpush1.bf16.msra.mxu0 %v1010
    %1388 = vmatprep.subr.bf16.mxu0 %v1015
    %1389 = vmatpush1.bf16.msra.mxu0 %v1014
    %1390 = vmatprep.subr.bf16.mxu0 %v1019
    %1391 = vmatpush1.bf16.msra.mxu0 %v1018
    %1392 = vmatprep.subr.bf16.mxu0 %v1023
    %1393 = vmatpush1.bf16.msra.mxu0 %v1022
    %1394 = vmatprep.mubr.bf16.mxu0 %v411
    %1395 = vmatmul.mubr.bf16.gmra.mrb[0].mxu0 %v410
    %v1396 = vpop.f32.mrb[0].mxu0
    %v1397 = vadd.f32 %v567, %v1396
    %v1398 = vpop.f32.mrb[0].mxu0
    %v1399 = vadd.f32 %v571, %v1398
    %v1400 = vpop.f32.mrb[0].mxu0
    %v1401 = vadd.f32 %v567, %v1400
    %v1402 = vpop.f32.mrb[0].mxu0
    %v1403 = vadd.f32 %v571, %v1402
    %1404 = vmatprep.mubr.bf16.mxu0 %v415
    %1405 = vmatmul.mubr.bf16.gmra.mrb[0].mxu0 %v414
    %v1406 = vpop.f32.mrb[0].mxu0
    %v1407 = vadd.f32 %v567, %v1406
    %v1408 = vpop.f32.mrb[0].mxu0
    %v1409 = vadd.f32 %v571, %v1408
    %v1410 = vpop.f32.mrb[0].mxu0
    %v1411 = vadd.f32 %v567, %v1410
    %v1412 = vpop.f32.mrb[0].mxu0
    %v1413 = vadd.f32 %v571, %v1412
    %1414 = vmatprep.mubr.bf16.mxu0 %v419
    %1415 = vmatmul.mubr.bf16.gmra.mrb[0].mxu0 %v418
    %v1416 = vpop.f32.mrb[0].mxu0
    %v1417 = vadd.f32 %v567, %v1416
    %v1418 = vpop.f32.mrb[0].mxu0
    %v1419 = vadd.f32 %v571, %v1418
    %v1420 = vpop.f32.mrb[0].mxu0
    %v1421 = vadd.f32 %v567, %v1420
    %v1422 = vpop.f32.mrb[0].mxu0
    %v1423 = vadd.f32 %v571, %v1422
    %1424 = vmatprep.mubr.bf16.mxu0 %v423
    %1425 = vmatmul.mubr.bf16.gmra.mrb[0].mxu0 %v422
    %v1426 = vpop.f32.mrb[0].mxu0
    %v1427 = vadd.f32 %v567, %v1426
    %v1428 = vpop.f32.mrb[0].mxu0
    %v1429 = vadd.f32 %v571, %v1428
    %v1430 = vpop.f32.mrb[0].mxu0
    %v1431 = vadd.f32 %v567, %v1430
    %v1432 = vpop.f32.mrb[0].mxu0
    %v1433 = vadd.f32 %v571, %v1432
    %1434 = vdwg.mxu0
    %1435 = vmatprep.subr.bf16.mxu0 %v1027
    %1436 = vmatpush1.bf16.msra.mxu0 %v1026
    %1437 = vmatprep.subr.bf16.mxu0 %v1031
    %1438 = vmatpush1.bf16.msra.mxu0 %v1030
    %1439 = vmatprep.subr.bf16.mxu0 %v1035
    %1440 = vmatpush1.bf16.msra.mxu0 %v1034
    %1441 = vmatprep.subr.bf16.mxu0 %v1039
    %1442 = vmatpush1.bf16.msra.mxu0 %v1038
    %1443 = vmatprep.subr.bf16.mxu0 %v1043
    %1444 = vmatpush1.bf16.msra.mxu0 %v1042
    %1445 = vmatprep.subr.bf16.mxu0 %v1047
    %1446 = vmatpush1.bf16.msra.mxu0 %v1046
    %1447 = vmatprep.subr.bf16.mxu0 %v1051
    %1448 = vmatpush1.bf16.msra.mxu0 %v1050
    %1449 = vmatprep.subr.bf16.mxu0 %v1055
    %1450 = vmatpush1.bf16.msra.mxu0 %v1054
    %1451 = vmatprep.subr.bf16.mxu0 %v1059
    %1452 = vmatpush1.bf16.msra.mxu0 %v1058
    %1453 = vmatprep.subr.bf16.mxu0 %v1063
    %1454 = vmatpush1.bf16.msra.mxu0 %v1062
    %1455 = vmatprep.subr.bf16.mxu0 %v1067
    %1456 = vmatpush1.bf16.msra.mxu0 %v1066
    %1457 = vmatprep.subr.bf16.mxu0 %v1071
    %1458 = vmatpush1.bf16.msra.mxu0 %v1070
    %1459 = vmatprep.subr.bf16.mxu0 %v1075
    %1460 = vmatpush1.bf16.msra.mxu0 %v1074
    %1461 = vmatprep.subr.bf16.mxu0 %v1079
    %1462 = vmatpush1.bf16.msra.mxu0 %v1078
    %1463 = vmatprep.subr.bf16.mxu0 %v1083
    %1464 = vmatpush1.bf16.msra.mxu0 %v1082
    %1465 = vmatprep.subr.bf16.mxu0 %v1087
    %1466 = vmatpush1.bf16.msra.mxu0 %v1086
    %1467 = vmatprep.mubr.bf16.mxu0 %v413
    %1468 = vmatmul.mubr.bf16.gmra.mrb[0].mxu0 %v412
    %v1469 = vpop.f32.mrb[0].mxu0
    %v1470 = vadd.f32 %v1397, %v1469
    %v1471 = vpop.f32.mrb[0].mxu0
    %v1472 = vadd.f32 %v1399, %v1471
    %v1473 = vpop.f32.mrb[0].mxu0
    %v1474 = vadd.f32 %v1401, %v1473
    %v1475 = vpop.f32.mrb[0].mxu0
    %v1476 = vadd.f32 %v1403, %v1475
    %1477 = vmatprep.mubr.bf16.mxu0 %v417
    %1478 = vmatmul.mubr.bf16.gmra.mrb[0].mxu0 %v416
    %v1479 = vpop.f32.mrb[0].mxu0
    %v1480 = vadd.f32 %v1407, %v1479
    %v1481 = vpop.f32.mrb[0].mxu0
    %v1482 = vadd.f32 %v1409, %v1481
    %v1483 = vpop.f32.mrb[0].mxu0
    %v1484 = vadd.f32 %v1411, %v1483
    %v1485 = vpop.f32.mrb[0].mxu0
    %v1486 = vadd.f32 %v1413, %v1485
    %1487 = vmatprep.mubr.bf16.mxu0 %v421
    %1488 = vmatmul.mubr.bf16.gmra.mrb[0].mxu0 %v420
    %v1489 = vpop.f32.mrb[0].mxu0
    %v1490 = vadd.f32 %v1417, %v1489
    %v1491 = vpop.f32.mrb[0].mxu0
    %v1492 = vadd.f32 %v1419, %v1491
    %v1493 = vpop.f32.mrb[0].mxu0
    %v1494 = vadd.f32 %v1421, %v1493
    %v1495 = vpop.f32.mrb[0].mxu0
    %v1496 = vadd.f32 %v1423, %v1495
    %1497 = vmatprep.mubr.bf16.mxu0 %v425
    %1498 = vmatmul.mubr.bf16.gmra.mrb[0].mxu0 %v424
    %v1499 = vpop.f32.mrb[0].mxu0
    %v1500 = vadd.f32 %v1427, %v1499
    %v1501 = vpop.f32.mrb[0].mxu0
    %v1502 = vadd.f32 %v1429, %v1501
    %v1503 = vpop.f32.mrb[0].mxu0
    %v1504 = vadd.f32 %v1431, %v1503
    %v1505 = vpop.f32.mrb[0].mxu0
    %v1506 = vadd.f32 %v1433, %v1505
    %1507 = vdwg.mxu0
    %v1508 = vmax.f32 %v1324, 0.0
    %v1509 = vmax.f32 %v1326, 0.0
    %v1510 = vmax.f32 %v1470, 0.0
    %v1511 = vmax.f32 %v1472, 0.0
    %v1512 = vmax.f32 %v1328, 0.0
    %v1513 = vmax.f32 %v1330, 0.0
    %v1514 = vmax.f32 %v1474, 0.0
    %v1515 = vmax.f32 %v1476, 0.0
    %v1516 = vmax.f32 %v1334, 0.0
    %v1517 = vmax.f32 %v1336, 0.0
    %v1518 = vmax.f32 %v1480, 0.0
    %v1519 = vmax.f32 %v1482, 0.0
    %v1520 = vmax.f32 %v1338, 0.0
    %v1521 = vmax.f32 %v1340, 0.0
    %v1522 = vmax.f32 %v1484, 0.0
    %v1523 = vmax.f32 %v1486, 0.0
    %v1524 = vmax.f32 %v1344, 0.0
    %v1525 = vmax.f32 %v1346, 0.0
    %v1526 = vmax.f32 %v1490, 0.0
    %v1527 = vmax.f32 %v1492, 0.0
    %v1528 = vmax.f32 %v1348, 0.0
    %v1529 = vmax.f32 %v1350, 0.0
    %v1530 = vmax.f32 %v1494, 0.0
    %v1531 = vmax.f32 %v1496, 0.0
    %v1532 = vmax.f32 %v1354, 0.0
    %v1533 = vmax.f32 %v1356, 0.0
    %v1534 = vmax.f32 %v1500, 0.0
    %v1535 = vmax.f32 %v1502, 0.0
    %v1536 = vmax.f32 %v1358, 0.0
    %v1537 = vmax.f32 %v1360, 0.0
    %v1538 = vmax.f32 %v1504, 0.0
    %v1539 = vmax.f32 %v1506, 0.0
    %v1540 = vpack.c.bf16 %v1512, %v1508
    %v1541 = vpack.c.bf16 %v1513, %v1509
    %v1542 = vpack.c.bf16 %v1514, %v1510
    %v1543 = vpack.c.bf16 %v1515, %v1511
    %v1544 = vpack.c.bf16 %v1520, %v1516
    %v1545 = vpack.c.bf16 %v1521, %v1517
    %v1546 = vpack.c.bf16 %v1522, %v1518
    %v1547 = vpack.c.bf16 %v1523, %v1519
    %v1548 = vpack.c.bf16 %v1528, %v1524
    %v1549 = vpack.c.bf16 %v1529, %v1525
    %v1550 = vpack.c.bf16 %v1530, %v1526
    %v1551 = vpack.c.bf16 %v1531, %v1527
    %v1552 = vpack.c.bf16 %v1536, %v1532
    %v1553 = vpack.c.bf16 %v1537, %v1533
    %v1554 = vpack.c.bf16 %v1538, %v1534
    %v1555 = vpack.c.bf16 %v1539, %v1535
    %v1556 = vld [vmem:[#allocation4] sm:$0xff]
    %v1557 = vld [vmem:[#allocation4 + $0x8] sm:$0xff]
    %v1558 = vld [vmem:[#allocation4 + $0x10] sm:$0xff]
    %v1559 = vld [vmem:[#allocation4 + $0x18] sm:$0xff]
    %v1560 = vld [vmem:[#allocation4 + $0x20] sm:$0xff]
    %v1561 = vld [vmem:[#allocation4 + $0x28] sm:$0xff]
    %v1562 = vld [vmem:[#allocation4 + $0x30] sm:$0xff]
    %v1563 = vld [vmem:[#allocation4 + $0x38] sm:$0xff]
    %v1564 = vld [vmem:[#allocation4 + $0x40] sm:$0xff]
    %v1565 = vld [vmem:[#allocation4 + $0x48] sm:$0xff]
    %v1566 = vld [vmem:[#allocation4 + $0x50] sm:$0xff]
    %v1567 = vld [vmem:[#allocation4 + $0x58] sm:$0xff]
    %v1568 = vld [vmem:[#allocation4 + $0x60] sm:$0xff]
    %v1569 = vld [vmem:[#allocation4 + $0x68] sm:$0xff]
    %v1570 = vld [vmem:[#allocation4 + $0x70] sm:$0xff]
    %v1571 = vld [vmem:[#allocation4 + $0x78] sm:$0xff]
    %v1572 = vld [vmem:[#allocation4 + $0x80] sm:$0xff]
    %v1573 = vld [vmem:[#allocation4 + $0x88] sm:$0xff]
    %v1574 = vld [vmem:[#allocation4 + $0x90] sm:$0xff]
    %v1575 = vld [vmem:[#allocation4 + $0x98] sm:$0xff]
    %v1576 = vld [vmem:[#allocation4 + $0xa0] sm:$0xff]
    %v1577 = vld [vmem:[#allocation4 + $0xa8] sm:$0xff]
    %v1578 = vld [vmem:[#allocation4 + $0xb0] sm:$0xff]
    %v1579 = vld [vmem:[#allocation4 + $0xb8] sm:$0xff]
    %v1580 = vld [vmem:[#allocation4 + $0xc0] sm:$0xff]
    %v1581 = vld [vmem:[#allocation4 + $0xc8] sm:$0xff]
    %v1582 = vld [vmem:[#allocation4 + $0xd0] sm:$0xff]
    %v1583 = vld [vmem:[#allocation4 + $0xd8] sm:$0xff]
    %v1584 = vld [vmem:[#allocation4 + $0xe0] sm:$0xff]
    %v1585 = vld [vmem:[#allocation4 + $0xe8] sm:$0xff]
    %v1586 = vld [vmem:[#allocation4 + $0xf0] sm:$0xff]
    %v1587 = vld [vmem:[#allocation4 + $0xf8] sm:$0xff]
    %v1588 = vld [vmem:[#allocation4 + $0x100] sm:$0xff]
    %v1589 = vld [vmem:[#allocation4 + $0x108] sm:$0xff]
    %v1590 = vld [vmem:[#allocation4 + $0x110] sm:$0xff]
    %v1591 = vld [vmem:[#allocation4 + $0x118] sm:$0xff]
    %v1592 = vld [vmem:[#allocation4 + $0x120] sm:$0xff]
    %v1593 = vld [vmem:[#allocation4 + $0x128] sm:$0xff]
    %v1594 = vld [vmem:[#allocation4 + $0x130] sm:$0xff]
    %v1595 = vld [vmem:[#allocation4 + $0x138] sm:$0xff]
    %v1596 = vld [vmem:[#allocation4 + $0x140] sm:$0xff]
    %v1597 = vld [vmem:[#allocation4 + $0x148] sm:$0xff]
    %v1598 = vld [vmem:[#allocation4 + $0x150] sm:$0xff]
    %v1599 = vld [vmem:[#allocation4 + $0x158] sm:$0xff]
    %v1600 = vld [vmem:[#allocation4 + $0x160] sm:$0xff]
    %v1601 = vld [vmem:[#allocation4 + $0x168] sm:$0xff]
    %v1602 = vld [vmem:[#allocation4 + $0x170] sm:$0xff]
    %v1603 = vld [vmem:[#allocation4 + $0x178] sm:$0xff]
    %v1604 = vld [vmem:[#allocation4 + $0x180] sm:$0xff]
    %v1605 = vld [vmem:[#allocation4 + $0x188] sm:$0xff]
    %v1606 = vld [vmem:[#allocation4 + $0x190] sm:$0xff]
    %v1607 = vld [vmem:[#allocation4 + $0x198] sm:$0xff]
    %v1608 = vld [vmem:[#allocation4 + $0x1a0] sm:$0xff]
    %v1609 = vld [vmem:[#allocation4 + $0x1a8] sm:$0xff]
    %v1610 = vld [vmem:[#allocation4 + $0x1b0] sm:$0xff]
    %v1611 = vld [vmem:[#allocation4 + $0x1b8] sm:$0xff]
    %v1612 = vld [vmem:[#allocation4 + $0x1c0] sm:$0xff]
    %v1613 = vld [vmem:[#allocation4 + $0x1c8] sm:$0xff]
    %v1614 = vld [vmem:[#allocation4 + $0x1d0] sm:$0xff]
    %v1615 = vld [vmem:[#allocation4 + $0x1d8] sm:$0xff]
    %v1616 = vld [vmem:[#allocation4 + $0x1e0] sm:$0xff]
    %v1617 = vld [vmem:[#allocation4 + $0x1e8] sm:$0xff]
    %v1618 = vld [vmem:[#allocation4 + $0x1f0] sm:$0xff]
    %v1619 = vld [vmem:[#allocation4 + $0x1f8] sm:$0xff]
    %v1620 = vld [vmem:[#allocation4 + $0x200] sm:$0xff]
    %v1621 = vld [vmem:[#allocation4 + $0x208] sm:$0xff]
    %v1622 = vld [vmem:[#allocation4 + $0x210] sm:$0xff]
    %v1623 = vld [vmem:[#allocation4 + $0x218] sm:$0xff]
    %v1624 = vld [vmem:[#allocation4 + $0x220] sm:$0xff]
    %v1625 = vld [vmem:[#allocation4 + $0x228] sm:$0xff]
    %v1626 = vld [vmem:[#allocation4 + $0x230] sm:$0xff]
    %v1627 = vld [vmem:[#allocation4 + $0x238] sm:$0xff]
    %v1628 = vld [vmem:[#allocation4 + $0x240] sm:$0xff]
    %v1629 = vld [vmem:[#allocation4 + $0x248] sm:$0xff]
    %v1630 = vld [vmem:[#allocation4 + $0x250] sm:$0xff]
    %v1631 = vld [vmem:[#allocation4 + $0x258] sm:$0xff]
    %v1632 = vld [vmem:[#allocation4 + $0x260] sm:$0xff]
    %v1633 = vld [vmem:[#allocation4 + $0x268] sm:$0xff]
    %v1634 = vld [vmem:[#allocation4 + $0x270] sm:$0xff]
    %v1635 = vld [vmem:[#allocation4 + $0x278] sm:$0xff]
    %v1636 = vld [vmem:[#allocation4 + $0x280] sm:$0xff]
    %v1637 = vld [vmem:[#allocation4 + $0x288] sm:$0xff]
    %v1638 = vld [vmem:[#allocation4 + $0x290] sm:$0xff]
    %v1639 = vld [vmem:[#allocation4 + $0x298] sm:$0xff]
    %v1640 = vld [vmem:[#allocation4 + $0x2a0] sm:$0xff]
    %v1641 = vld [vmem:[#allocation4 + $0x2a8] sm:$0xff]
    %v1642 = vld [vmem:[#allocation4 + $0x2b0] sm:$0xff]
    %v1643 = vld [vmem:[#allocation4 + $0x2b8] sm:$0xff]
    %v1644 = vld [vmem:[#allocation4 + $0x2c0] sm:$0xff]
    %v1645 = vld [vmem:[#allocation4 + $0x2c8] sm:$0xff]
    %v1646 = vld [vmem:[#allocation4 + $0x2d0] sm:$0xff]
    %v1647 = vld [vmem:[#allocation4 + $0x2d8] sm:$0xff]
    %v1648 = vld [vmem:[#allocation4 + $0x2e0] sm:$0xff]
    %v1649 = vld [vmem:[#allocation4 + $0x2e8] sm:$0xff]
    %v1650 = vld [vmem:[#allocation4 + $0x2f0] sm:$0xff]
    %v1651 = vld [vmem:[#allocation4 + $0x2f8] sm:$0xff]
    %v1652 = vld [vmem:[#allocation4 + $0x300] sm:$0xff]
    %v1653 = vld [vmem:[#allocation4 + $0x308] sm:$0xff]
    %v1654 = vld [vmem:[#allocation4 + $0x310] sm:$0xff]
    %v1655 = vld [vmem:[#allocation4 + $0x318] sm:$0xff]
    %v1656 = vld [vmem:[#allocation4 + $0x320] sm:$0xff]
    %v1657 = vld [vmem:[#allocation4 + $0x328] sm:$0xff]
    %v1658 = vld [vmem:[#allocation4 + $0x330] sm:$0xff]
    %v1659 = vld [vmem:[#allocation4 + $0x338] sm:$0xff]
    %v1660 = vld [vmem:[#allocation4 + $0x340] sm:$0xff]
    %v1661 = vld [vmem:[#allocation4 + $0x348] sm:$0xff]
    %v1662 = vld [vmem:[#allocation4 + $0x350] sm:$0xff]
    %v1663 = vld [vmem:[#allocation4 + $0x358] sm:$0xff]
    %v1664 = vld [vmem:[#allocation4 + $0x360] sm:$0xff]
    %v1665 = vld [vmem:[#allocation4 + $0x368] sm:$0xff]
    %v1666 = vld [vmem:[#allocation4 + $0x370] sm:$0xff]
    %v1667 = vld [vmem:[#allocation4 + $0x378] sm:$0xff]
    %v1668 = vld [vmem:[#allocation4 + $0x380] sm:$0xff]
    %v1669 = vld [vmem:[#allocation4 + $0x388] sm:$0xff]
    %v1670 = vld [vmem:[#allocation4 + $0x390] sm:$0xff]
    %v1671 = vld [vmem:[#allocation4 + $0x398] sm:$0xff]
    %v1672 = vld [vmem:[#allocation4 + $0x3a0] sm:$0xff]
    %v1673 = vld [vmem:[#allocation4 + $0x3a8] sm:$0xff]
    %v1674 = vld [vmem:[#allocation4 + $0x3b0] sm:$0xff]
    %v1675 = vld [vmem:[#allocation4 + $0x3b8] sm:$0xff]
    %v1676 = vld [vmem:[#allocation4 + $0x3c0] sm:$0xff]
    %v1677 = vld [vmem:[#allocation4 + $0x3c8] sm:$0xff]
    %v1678 = vld [vmem:[#allocation4 + $0x3d0] sm:$0xff]
    %v1679 = vld [vmem:[#allocation4 + $0x3d8] sm:$0xff]
    %v1680 = vld [vmem:[#allocation4 + $0x3e0] sm:$0xff]
    %v1681 = vld [vmem:[#allocation4 + $0x3e8] sm:$0xff]
    %v1682 = vld [vmem:[#allocation4 + $0x3f0] sm:$0xff]
    %v1683 = vld [vmem:[#allocation4 + $0x3f8] sm:$0xff]
    %v1684 = vld [vmem:[%s6] sm:$0xf]
    %v1686 = vlaneseq
    %v1687 = vshrl.u32 %v1686, 7
    %v1688 = vsub.s32 0, %v1687
    %v1689 = vrot.slane %v1684, %v1688
    %v1690 = vlaneseq
    %v1691 = vshrl.u32 %v1690, 7
    %v1692 = vsub.s32 1, %v1691
    %v1693 = vrot.slane %v1684, %v1692
    %v1694 = vlaneseq
    %v1695 = vshrl.u32 %v1694, 7
    %v1696 = vsub.s32 2, %v1695
    %v1697 = vrot.slane %v1684, %v1696
    %v1698 = vlaneseq
    %v1699 = vshrl.u32 %v1698, 7
    %v1700 = vsub.s32 3, %v1699
    %v1701 = vrot.slane %v1684, %v1700
    %v1834 = vunpack.c.l.b16 %v1556
    %v1835 = vunpack.c.h.b16 %v1556
    %v1836 = vunpack.c.l.b16 %v1557
    %v1837 = vunpack.c.h.b16 %v1557
    %v1838 = vunpack.c.l.b16 %v1558
    %v1839 = vunpack.c.h.b16 %v1558
    %v1840 = vunpack.c.l.b16 %v1559
    %v1841 = vunpack.c.h.b16 %v1559
    %v1842 = vunpack.c.l.b16 %v1560
    %v1843 = vunpack.c.h.b16 %v1560
    %v1844 = vunpack.c.l.b16 %v1561
    %v1845 = vunpack.c.h.b16 %v1561
    %v1846 = vunpack.c.l.b16 %v1562
    %v1847 = vunpack.c.h.b16 %v1562
    %v1848 = vunpack.c.l.b16 %v1563
    %v1849 = vunpack.c.h.b16 %v1563
    %v1850 = vunpack.c.l.b16 %v1564
    %v1851 = vunpack.c.h.b16 %v1564
    %v1852 = vunpack.c.l.b16 %v1565
    %v1853 = vunpack.c.h.b16 %v1565
    %v1854 = vunpack.c.l.b16 %v1566
    %v1855 = vunpack.c.h.b16 %v1566
    %v1856 = vunpack.c.l.b16 %v1567
    %v1857 = vunpack.c.h.b16 %v1567
    %v1858 = vunpack.c.l.b16 %v1568
    %v1859 = vunpack.c.h.b16 %v1568
    %v1860 = vunpack.c.l.b16 %v1569
    %v1861 = vunpack.c.h.b16 %v1569
    %v1862 = vunpack.c.l.b16 %v1570
    %v1863 = vunpack.c.h.b16 %v1570
    %v1864 = vunpack.c.l.b16 %v1571
    %v1865 = vunpack.c.h.b16 %v1571
    %v1866 = vunpack.c.l.b16 %v1572
    %v1867 = vunpack.c.h.b16 %v1572
    %v1868 = vunpack.c.l.b16 %v1573
    %v1869 = vunpack.c.h.b16 %v1573
    %v1870 = vunpack.c.l.b16 %v1574
    %v1871 = vunpack.c.h.b16 %v1574
    %v1872 = vunpack.c.l.b16 %v1575
    %v1873 = vunpack.c.h.b16 %v1575
    %v1874 = vunpack.c.l.b16 %v1576
    %v1875 = vunpack.c.h.b16 %v1576
    %v1876 = vunpack.c.l.b16 %v1577
    %v1877 = vunpack.c.h.b16 %v1577
    %v1878 = vunpack.c.l.b16 %v1578
    %v1879 = vunpack.c.h.b16 %v1578
    %v1880 = vunpack.c.l.b16 %v1579
    %v1881 = vunpack.c.h.b16 %v1579
    %v1882 = vunpack.c.l.b16 %v1580
    %v1883 = vunpack.c.h.b16 %v1580
    %v1884 = vunpack.c.l.b16 %v1581
    %v1885 = vunpack.c.h.b16 %v1581
    %v1886 = vunpack.c.l.b16 %v1582
    %v1887 = vunpack.c.h.b16 %v1582
    %v1888 = vunpack.c.l.b16 %v1583
    %v1889 = vunpack.c.h.b16 %v1583
    %v1890 = vunpack.c.l.b16 %v1584
    %v1891 = vunpack.c.h.b16 %v1584
    %v1892 = vunpack.c.l.b16 %v1585
    %v1893 = vunpack.c.h.b16 %v1585
    %v1894 = vunpack.c.l.b16 %v1586
    %v1895 = vunpack.c.h.b16 %v1586
    %v1896 = vunpack.c.l.b16 %v1587
    %v1897 = vunpack.c.h.b16 %v1587
    %v1898 = vunpack.c.l.b16 %v1588
    %v1899 = vunpack.c.h.b16 %v1588
    %v1900 = vunpack.c.l.b16 %v1589
    %v1901 = vunpack.c.h.b16 %v1589
    %v1902 = vunpack.c.l.b16 %v1590
    %v1903 = vunpack.c.h.b16 %v1590
    %v1904 = vunpack.c.l.b16 %v1591
    %v1905 = vunpack.c.h.b16 %v1591
    %v1906 = vunpack.c.l.b16 %v1592
    %v1907 = vunpack.c.h.b16 %v1592
    %v1908 = vunpack.c.l.b16 %v1593
    %v1909 = vunpack.c.h.b16 %v1593
    %v1910 = vunpack.c.l.b16 %v1594
    %v1911 = vunpack.c.h.b16 %v1594
    %v1912 = vunpack.c.l.b16 %v1595
    %v1913 = vunpack.c.h.b16 %v1595
    %v1914 = vunpack.c.l.b16 %v1596
    %v1915 = vunpack.c.h.b16 %v1596
    %v1916 = vunpack.c.l.b16 %v1597
    %v1917 = vunpack.c.h.b16 %v1597
    %v1918 = vunpack.c.l.b16 %v1598
    %v1919 = vunpack.c.h.b16 %v1598
    %v1920 = vunpack.c.l.b16 %v1599
    %v1921 = vunpack.c.h.b16 %v1599
    %v1922 = vunpack.c.l.b16 %v1600
    %v1923 = vunpack.c.h.b16 %v1600
    %v1924 = vunpack.c.l.b16 %v1601
    %v1925 = vunpack.c.h.b16 %v1601
    %v1926 = vunpack.c.l.b16 %v1602
    %v1927 = vunpack.c.h.b16 %v1602
    %v1928 = vunpack.c.l.b16 %v1603
    %v1929 = vunpack.c.h.b16 %v1603
    %v1930 = vunpack.c.l.b16 %v1604
    %v1931 = vunpack.c.h.b16 %v1604
    %v1932 = vunpack.c.l.b16 %v1605
    %v1933 = vunpack.c.h.b16 %v1605
    %v1934 = vunpack.c.l.b16 %v1606
    %v1935 = vunpack.c.h.b16 %v1606
    %v1936 = vunpack.c.l.b16 %v1607
    %v1937 = vunpack.c.h.b16 %v1607
    %v1938 = vunpack.c.l.b16 %v1608
    %v1939 = vunpack.c.h.b16 %v1608
    %v1940 = vunpack.c.l.b16 %v1609
    %v1941 = vunpack.c.h.b16 %v1609
    %v1942 = vunpack.c.l.b16 %v1610
    %v1943 = vunpack.c.h.b16 %v1610
    %v1944 = vunpack.c.l.b16 %v1611
    %v1945 = vunpack.c.h.b16 %v1611
    %v1946 = vunpack.c.l.b16 %v1612
    %v1947 = vunpack.c.h.b16 %v1612
    %v1948 = vunpack.c.l.b16 %v1613
    %v1949 = vunpack.c.h.b16 %v1613
    %v1950 = vunpack.c.l.b16 %v1614
    %v1951 = vunpack.c.h.b16 %v1614
    %v1952 = vunpack.c.l.b16 %v1615
    %v1953 = vunpack.c.h.b16 %v1615
    %v1954 = vunpack.c.l.b16 %v1616
    %v1955 = vunpack.c.h.b16 %v1616
    %v1956 = vunpack.c.l.b16 %v1617
    %v1957 = vunpack.c.h.b16 %v1617
    %v1958 = vunpack.c.l.b16 %v1618
    %v1959 = vunpack.c.h.b16 %v1618
    %v1960 = vunpack.c.l.b16 %v1619
    %v1961 = vunpack.c.h.b16 %v1619
    %v1962 = vunpack.c.l.b16 %v1620
    %v1963 = vunpack.c.h.b16 %v1620
    %v1964 = vunpack.c.l.b16 %v1621
    %v1965 = vunpack.c.h.b16 %v1621
    %v1966 = vunpack.c.l.b16 %v1622
    %v1967 = vunpack.c.h.b16 %v1622
    %v1968 = vunpack.c.l.b16 %v1623
    %v1969 = vunpack.c.h.b16 %v1623
    %v1970 = vunpack.c.l.b16 %v1624
    %v1971 = vunpack.c.h.b16 %v1624
    %v1972 = vunpack.c.l.b16 %v1625
    %v1973 = vunpack.c.h.b16 %v1625
    %v1974 = vunpack.c.l.b16 %v1626
    %v1975 = vunpack.c.h.b16 %v1626
    %v1976 = vunpack.c.l.b16 %v1627
    %v1977 = vunpack.c.h.b16 %v1627
    %v1978 = vunpack.c.l.b16 %v1628
    %v1979 = vunpack.c.h.b16 %v1628
    %v1980 = vunpack.c.l.b16 %v1629
    %v1981 = vunpack.c.h.b16 %v1629
    %v1982 = vunpack.c.l.b16 %v1630
    %v1983 = vunpack.c.h.b16 %v1630
    %v1984 = vunpack.c.l.b16 %v1631
    %v1985 = vunpack.c.h.b16 %v1631
    %v1986 = vunpack.c.l.b16 %v1632
    %v1987 = vunpack.c.h.b16 %v1632
    %v1988 = vunpack.c.l.b16 %v1633
    %v1989 = vunpack.c.h.b16 %v1633
    %v1990 = vunpack.c.l.b16 %v1634
    %v1991 = vunpack.c.h.b16 %v1634
    %v1992 = vunpack.c.l.b16 %v1635
    %v1993 = vunpack.c.h.b16 %v1635
    %v1994 = vunpack.c.l.b16 %v1636
    %v1995 = vunpack.c.h.b16 %v1636
    %v1996 = vunpack.c.l.b16 %v1637
    %v1997 = vunpack.c.h.b16 %v1637
    %v1998 = vunpack.c.l.b16 %v1638
    %v1999 = vunpack.c.h.b16 %v1638
    %v2000 = vunpack.c.l.b16 %v1639
    %v2001 = vunpack.c.h.b16 %v1639
    %v2002 = vunpack.c.l.b16 %v1640
    %v2003 = vunpack.c.h.b16 %v1640
    %v2004 = vunpack.c.l.b16 %v1641
    %v2005 = vunpack.c.h.b16 %v1641
    %v2006 = vunpack.c.l.b16 %v1642
    %v2007 = vunpack.c.h.b16 %v1642
    %v2008 = vunpack.c.l.b16 %v1643
    %v2009 = vunpack.c.h.b16 %v1643
    %v2010 = vunpack.c.l.b16 %v1644
    %v2011 = vunpack.c.h.b16 %v1644
    %v2012 = vunpack.c.l.b16 %v1645
    %v2013 = vunpack.c.h.b16 %v1645
    %v2014 = vunpack.c.l.b16 %v1646
    %v2015 = vunpack.c.h.b16 %v1646
    %v2016 = vunpack.c.l.b16 %v1647
    %v2017 = vunpack.c.h.b16 %v1647
    %v2018 = vunpack.c.l.b16 %v1648
    %v2019 = vunpack.c.h.b16 %v1648
    %v2020 = vunpack.c.l.b16 %v1649
    %v2021 = vunpack.c.h.b16 %v1649
    %v2022 = vunpack.c.l.b16 %v1650
    %v2023 = vunpack.c.h.b16 %v1650
    %v2024 = vunpack.c.l.b16 %v1651
    %v2025 = vunpack.c.h.b16 %v1651
    %v2026 = vunpack.c.l.b16 %v1652
    %v2027 = vunpack.c.h.b16 %v1652
    %v2028 = vunpack.c.l.b16 %v1653
    %v2029 = vunpack.c.h.b16 %v1653
    %v2030 = vunpack.c.l.b16 %v1654
    %v2031 = vunpack.c.h.b16 %v1654
    %v2032 = vunpack.c.l.b16 %v1655
    %v2033 = vunpack.c.h.b16 %v1655
    %v2034 = vunpack.c.l.b16 %v1656
    %v2035 = vunpack.c.h.b16 %v1656
    %v2036 = vunpack.c.l.b16 %v1657
    %v2037 = vunpack.c.h.b16 %v1657
    %v2038 = vunpack.c.l.b16 %v1658
    %v2039 = vunpack.c.h.b16 %v1658
    %v2040 = vunpack.c.l.b16 %v1659
    %v2041 = vunpack.c.h.b16 %v1659
    %v2042 = vunpack.c.l.b16 %v1660
    %v2043 = vunpack.c.h.b16 %v1660
    %v2044 = vunpack.c.l.b16 %v1661
    %v2045 = vunpack.c.h.b16 %v1661
    %v2046 = vunpack.c.l.b16 %v1662
    %v2047 = vunpack.c.h.b16 %v1662
    %v2048 = vunpack.c.l.b16 %v1663
    %v2049 = vunpack.c.h.b16 %v1663
    %v2050 = vunpack.c.l.b16 %v1664
    %v2051 = vunpack.c.h.b16 %v1664
    %v2052 = vunpack.c.l.b16 %v1665
    %v2053 = vunpack.c.h.b16 %v1665
    %v2054 = vunpack.c.l.b16 %v1666
    %v2055 = vunpack.c.h.b16 %v1666
    %v2056 = vunpack.c.l.b16 %v1667
    %v2057 = vunpack.c.h.b16 %v1667
    %v2058 = vunpack.c.l.b16 %v1668
    %v2059 = vunpack.c.h.b16 %v1668
    %v2060 = vunpack.c.l.b16 %v1669
    %v2061 = vunpack.c.h.b16 %v1669
    %v2062 = vunpack.c.l.b16 %v1670
    %v2063 = vunpack.c.h.b16 %v1670
    %v2064 = vunpack.c.l.b16 %v1671
    %v2065 = vunpack.c.h.b16 %v1671
    %v2066 = vunpack.c.l.b16 %v1672
    %v2067 = vunpack.c.h.b16 %v1672
    %v2068 = vunpack.c.l.b16 %v1673
    %v2069 = vunpack.c.h.b16 %v1673
    %v2070 = vunpack.c.l.b16 %v1674
    %v2071 = vunpack.c.h.b16 %v1674
    %v2072 = vunpack.c.l.b16 %v1675
    %v2073 = vunpack.c.h.b16 %v1675
    %v2074 = vunpack.c.l.b16 %v1676
    %v2075 = vunpack.c.h.b16 %v1676
    %v2076 = vunpack.c.l.b16 %v1677
    %v2077 = vunpack.c.h.b16 %v1677
    %v2078 = vunpack.c.l.b16 %v1678
    %v2079 = vunpack.c.h.b16 %v1678
    %v2080 = vunpack.c.l.b16 %v1679
    %v2081 = vunpack.c.h.b16 %v1679
    %v2082 = vunpack.c.l.b16 %v1680
    %v2083 = vunpack.c.h.b16 %v1680
    %v2084 = vunpack.c.l.b16 %v1681
    %v2085 = vunpack.c.h.b16 %v1681
    %v2086 = vunpack.c.l.b16 %v1682
    %v2087 = vunpack.c.h.b16 %v1682
    %v2088 = vunpack.c.l.b16 %v1683
    %v2089 = vunpack.c.h.b16 %v1683
    %v2090 = vpack.c.b16 %v1838, %v1834
    %v2091 = vpack.c.b16 %v1839, %v1835
    %v2092 = vpack.c.b16 %v1840, %v1836
    %v2093 = vpack.c.b16 %v1841, %v1837
    %v2094 = vpack.c.b16 %v1846, %v1842
    %v2095 = vpack.c.b16 %v1847, %v1843
    %v2096 = vpack.c.b16 %v1848, %v1844
    %v2097 = vpack.c.b16 %v1849, %v1845
    %v2098 = vpack.c.b16 %v1854, %v1850
    %v2099 = vpack.c.b16 %v1855, %v1851
    %v2100 = vpack.c.b16 %v1856, %v1852
    %v2101 = vpack.c.b16 %v1857, %v1853
    %v2102 = vpack.c.b16 %v1862, %v1858
    %v2103 = vpack.c.b16 %v1863, %v1859
    %v2104 = vpack.c.b16 %v1864, %v1860
    %v2105 = vpack.c.b16 %v1865, %v1861
    %v2106 = vpack.c.b16 %v1870, %v1866
    %v2107 = vpack.c.b16 %v1871, %v1867
    %v2108 = vpack.c.b16 %v1872, %v1868
    %v2109 = vpack.c.b16 %v1873, %v1869
    %v2110 = vpack.c.b16 %v1878, %v1874
    %v2111 = vpack.c.b16 %v1879, %v1875
    %v2112 = vpack.c.b16 %v1880, %v1876
    %v2113 = vpack.c.b16 %v1881, %v1877
    %v2114 = vpack.c.b16 %v1886, %v1882
    %v2115 = vpack.c.b16 %v1887, %v1883
    %v2116 = vpack.c.b16 %v1888, %v1884
    %v2117 = vpack.c.b16 %v1889, %v1885
    %v2118 = vpack.c.b16 %v1894, %v1890
    %v2119 = vpack.c.b16 %v1895, %v1891
    %v2120 = vpack.c.b16 %v1896, %v1892
    %v2121 = vpack.c.b16 %v1897, %v1893
    %v2122 = vpack.c.b16 %v1902, %v1898
    %v2123 = vpack.c.b16 %v1903, %v1899
    %v2124 = vpack.c.b16 %v1904, %v1900
    %v2125 = vpack.c.b16 %v1905, %v1901
    %v2126 = vpack.c.b16 %v1910, %v1906
    %v2127 = vpack.c.b16 %v1911, %v1907
    %v2128 = vpack.c.b16 %v1912, %v1908
    %v2129 = vpack.c.b16 %v1913, %v1909
    %v2130 = vpack.c.b16 %v1918, %v1914
    %v2131 = vpack.c.b16 %v1919, %v1915
    %v2132 = vpack.c.b16 %v1920, %v1916
    %v2133 = vpack.c.b16 %v1921, %v1917
    %v2134 = vpack.c.b16 %v1926, %v1922
    %v2135 = vpack.c.b16 %v1927, %v1923
    %v2136 = vpack.c.b16 %v1928, %v1924
    %v2137 = vpack.c.b16 %v1929, %v1925
    %v2138 = vpack.c.b16 %v1934, %v1930
    %v2139 = vpack.c.b16 %v1935, %v1931
    %v2140 = vpack.c.b16 %v1936, %v1932
    %v2141 = vpack.c.b16 %v1937, %v1933
    %v2142 = vpack.c.b16 %v1942, %v1938
    %v2143 = vpack.c.b16 %v1943, %v1939
    %v2144 = vpack.c.b16 %v1944, %v1940
    %v2145 = vpack.c.b16 %v1945, %v1941
    %v2146 = vpack.c.b16 %v1950, %v1946
    %v2147 = vpack.c.b16 %v1951, %v1947
    %v2148 = vpack.c.b16 %v1952, %v1948
    %v2149 = vpack.c.b16 %v1953, %v1949
    %v2150 = vpack.c.b16 %v1958, %v1954
    %v2151 = vpack.c.b16 %v1959, %v1955
    %v2152 = vpack.c.b16 %v1960, %v1956
    %v2153 = vpack.c.b16 %v1961, %v1957
    %v2154 = vpack.c.b16 %v1966, %v1962
    %v2155 = vpack.c.b16 %v1967, %v1963
    %v2156 = vpack.c.b16 %v1968, %v1964
    %v2157 = vpack.c.b16 %v1969, %v1965
    %v2158 = vpack.c.b16 %v1974, %v1970
    %v2159 = vpack.c.b16 %v1975, %v1971
    %v2160 = vpack.c.b16 %v1976, %v1972
    %v2161 = vpack.c.b16 %v1977, %v1973
    %v2162 = vpack.c.b16 %v1982, %v1978
    %v2163 = vpack.c.b16 %v1983, %v1979
    %v2164 = vpack.c.b16 %v1984, %v1980
    %v2165 = vpack.c.b16 %v1985, %v1981
    %v2166 = vpack.c.b16 %v1990, %v1986
    %v2167 = vpack.c.b16 %v1991, %v1987
    %v2168 = vpack.c.b16 %v1992, %v1988
    %v2169 = vpack.c.b16 %v1993, %v1989
    %v2170 = vpack.c.b16 %v1998, %v1994
    %v2171 = vpack.c.b16 %v1999, %v1995
    %v2172 = vpack.c.b16 %v2000, %v1996
    %v2173 = vpack.c.b16 %v2001, %v1997
    %v2174 = vpack.c.b16 %v2006, %v2002
    %v2175 = vpack.c.b16 %v2007, %v2003
    %v2176 = vpack.c.b16 %v2008, %v2004
    %v2177 = vpack.c.b16 %v2009, %v2005
    %v2178 = vpack.c.b16 %v2014, %v2010
    %v2179 = vpack.c.b16 %v2015, %v2011
    %v2180 = vpack.c.b16 %v2016, %v2012
    %v2181 = vpack.c.b16 %v2017, %v2013
    %v2182 = vpack.c.b16 %v2022, %v2018
    %v2183 = vpack.c.b16 %v2023, %v2019
    %v2184 = vpack.c.b16 %v2024, %v2020
    %v2185 = vpack.c.b16 %v2025, %v2021
    %v2186 = vpack.c.b16 %v2030, %v2026
    %v2187 = vpack.c.b16 %v2031, %v2027
    %v2188 = vpack.c.b16 %v2032, %v2028
    %v2189 = vpack.c.b16 %v2033, %v2029
    %v2190 = vpack.c.b16 %v2038, %v2034
    %v2191 = vpack.c.b16 %v2039, %v2035
    %v2192 = vpack.c.b16 %v2040, %v2036
    %v2193 = vpack.c.b16 %v2041, %v2037
    %v2194 = vpack.c.b16 %v2046, %v2042
    %v2195 = vpack.c.b16 %v2047, %v2043
    %v2196 = vpack.c.b16 %v2048, %v2044
    %v2197 = vpack.c.b16 %v2049, %v2045
    %v2198 = vpack.c.b16 %v2054, %v2050
    %v2199 = vpack.c.b16 %v2055, %v2051
    %v2200 = vpack.c.b16 %v2056, %v2052
    %v2201 = vpack.c.b16 %v2057, %v2053
    %v2202 = vpack.c.b16 %v2062, %v2058
    %v2203 = vpack.c.b16 %v2063, %v2059
    %v2204 = vpack.c.b16 %v2064, %v2060
    %v2205 = vpack.c.b16 %v2065, %v2061
    %v2206 = vpack.c.b16 %v2070, %v2066
    %v2207 = vpack.c.b16 %v2071, %v2067
    %v2208 = vpack.c.b16 %v2072, %v2068
    %v2209 = vpack.c.b16 %v2073, %v2069
    %v2210 = vpack.c.b16 %v2078, %v2074
    %v2211 = vpack.c.b16 %v2079, %v2075
    %v2212 = vpack.c.b16 %v2080, %v2076
    %v2213 = vpack.c.b16 %v2081, %v2077
    %v2214 = vpack.c.b16 %v2086, %v2082
    %v2215 = vpack.c.b16 %v2087, %v2083
    %v2216 = vpack.c.b16 %v2088, %v2084
    %v2217 = vpack.c.b16 %v2089, %v2085
    %2346 = vmatprep.subr.bf16.mxu0 %v2091
    %2347 = vmatpush1.bf16.msra.mxu0 %v2090
    %2348 = vmatprep.subr.bf16.mxu0 %v2095
    %2349 = vmatpush1.bf16.msra.mxu0 %v2094
    %2350 = vmatprep.subr.bf16.mxu0 %v2099
    %2351 = vmatpush1.bf16.msra.mxu0 %v2098
    %2352 = vmatprep.subr.bf16.mxu0 %v2103
    %2353 = vmatpush1.bf16.msra.mxu0 %v2102
    %2354 = vmatprep.subr.bf16.mxu0 %v2107
    %2355 = vmatpush1.bf16.msra.mxu0 %v2106
    %2356 = vmatprep.subr.bf16.mxu0 %v2111
    %2357 = vmatpush1.bf16.msra.mxu0 %v2110
    %2358 = vmatprep.subr.bf16.mxu0 %v2115
    %2359 = vmatpush1.bf16.msra.mxu0 %v2114
    %2360 = vmatprep.subr.bf16.mxu0 %v2119
    %2361 = vmatpush1.bf16.msra.mxu0 %v2118
    %2362 = vmatprep.subr.bf16.mxu0 %v2123
    %2363 = vmatpush1.bf16.msra.mxu0 %v2122
    %2364 = vmatprep.subr.bf16.mxu0 %v2127
    %2365 = vmatpush1.bf16.msra.mxu0 %v2126
    %2366 = vmatprep.subr.bf16.mxu0 %v2131
    %2367 = vmatpush1.bf16.msra.mxu0 %v2130
    %2368 = vmatprep.subr.bf16.mxu0 %v2135
    %2369 = vmatpush1.bf16.msra.mxu0 %v2134
    %2370 = vmatprep.subr.bf16.mxu0 %v2139
    %2371 = vmatpush1.bf16.msra.mxu0 %v2138
    %2372 = vmatprep.subr.bf16.mxu0 %v2143
    %2373 = vmatpush1.bf16.msra.mxu0 %v2142
    %2374 = vmatprep.subr.bf16.mxu0 %v2147
    %2375 = vmatpush1.bf16.msra.mxu0 %v2146
    %2376 = vmatprep.subr.bf16.mxu0 %v2151
    %2377 = vmatpush1.bf16.msra.mxu0 %v2150
    %2378 = vmatprep.mubr.bf16.mxu0 %v1541
    %2379 = vmatmul.mubr.bf16.gmra.mrb[0].mxu0 %v1540
    %v2380 = vpop.f32.mrb[0].mxu0
    %v2381 = vadd.f32 %v1689, %v2380
    %v2382 = vpop.f32.mrb[0].mxu0
    %v2383 = vadd.f32 %v1693, %v2382
    %v2384 = vpop.f32.mrb[0].mxu0
    %v2385 = vadd.f32 %v1689, %v2384
    %v2386 = vpop.f32.mrb[0].mxu0
    %v2387 = vadd.f32 %v1693, %v2386
    %2388 = vmatprep.mubr.bf16.mxu0 %v1545
    %2389 = vmatmul.mubr.bf16.gmra.mrb[0].mxu0 %v1544
    %v2390 = vpop.f32.mrb[0].mxu0
    %v2391 = vadd.f32 %v1689, %v2390
    %v2392 = vpop.f32.mrb[0].mxu0
    %v2393 = vadd.f32 %v1693, %v2392
    %v2394 = vpop.f32.mrb[0].mxu0
    %v2395 = vadd.f32 %v1689, %v2394
    %v2396 = vpop.f32.mrb[0].mxu0
    %v2397 = vadd.f32 %v1693, %v2396
    %2398 = vmatprep.mubr.bf16.mxu0 %v1549
    %2399 = vmatmul.mubr.bf16.gmra.mrb[0].mxu0 %v1548
    %v2400 = vpop.f32.mrb[0].mxu0
    %v2401 = vadd.f32 %v1689, %v2400
    %v2402 = vpop.f32.mrb[0].mxu0
    %v2403 = vadd.f32 %v1693, %v2402
    %v2404 = vpop.f32.mrb[0].mxu0
    %v2405 = vadd.f32 %v1689, %v2404
    %v2406 = vpop.f32.mrb[0].mxu0
    %v2407 = vadd.f32 %v1693, %v2406
    %2408 = vmatprep.mubr.bf16.mxu0 %v1553
    %2409 = vmatmul.mubr.bf16.gmra.mrb[0].mxu0 %v1552
    %v2410 = vpop.f32.mrb[0].mxu0
    %v2411 = vadd.f32 %v1689, %v2410
    %v2412 = vpop.f32.mrb[0].mxu0
    %v2413 = vadd.f32 %v1693, %v2412
    %v2414 = vpop.f32.mrb[0].mxu0
    %v2415 = vadd.f32 %v1689, %v2414
    %v2416 = vpop.f32.mrb[0].mxu0
    %v2417 = vadd.f32 %v1693, %v2416
    %2418 = vdwg.mxu0
    %2419 = vmatprep.subr.bf16.mxu0 %v2155
    %2420 = vmatpush1.bf16.msra.mxu0 %v2154
    %2421 = vmatprep.subr.bf16.mxu0 %v2159
    %2422 = vmatpush1.bf16.msra.mxu0 %v2158
    %2423 = vmatprep.subr.bf16.mxu0 %v2163
    %2424 = vmatpush1.bf16.msra.mxu0 %v2162
    %2425 = vmatprep.subr.bf16.mxu0 %v2167
    %2426 = vmatpush1.bf16.msra.mxu0 %v2166
    %2427 = vmatprep.subr.bf16.mxu0 %v2171
    %2428 = vmatpush1.bf16.msra.mxu0 %v2170
    %2429 = vmatprep.subr.bf16.mxu0 %v2175
    %2430 = vmatpush1.bf16.msra.mxu0 %v2174
    %2431 = vmatprep.subr.bf16.mxu0 %v2179
    %2432 = vmatpush1.bf16.msra.mxu0 %v2178
    %2433 = vmatprep.subr.bf16.mxu0 %v2183
    %2434 = vmatpush1.bf16.msra.mxu0 %v2182
    %2435 = vmatprep.subr.bf16.mxu0 %v2187
    %2436 = vmatpush1.bf16.msra.mxu0 %v2186
    %2437 = vmatprep.subr.bf16.mxu0 %v2191
    %2438 = vmatpush1.bf16.msra.mxu0 %v2190
    %2439 = vmatprep.subr.bf16.mxu0 %v2195
    %2440 = vmatpush1.bf16.msra.mxu0 %v2194
    %2441 = vmatprep.subr.bf16.mxu0 %v2199
    %2442 = vmatpush1.bf16.msra.mxu0 %v2198
    %2443 = vmatprep.subr.bf16.mxu0 %v2203
    %2444 = vmatpush1.bf16.msra.mxu0 %v2202
    %2445 = vmatprep.subr.bf16.mxu0 %v2207
    %2446 = vmatpush1.bf16.msra.mxu0 %v2206
    %2447 = vmatprep.subr.bf16.mxu0 %v2211
    %2448 = vmatpush1.bf16.msra.mxu0 %v2210
    %2449 = vmatprep.subr.bf16.mxu0 %v2215
    %2450 = vmatpush1.bf16.msra.mxu0 %v2214
    %2451 = vmatprep.mubr.bf16.mxu0 %v1543
    %2452 = vmatmul.mubr.bf16.gmra.mrb[0].mxu0 %v1542
    %v2453 = vpop.f32.mrb[0].mxu0
    %v2454 = vadd.f32 %v2381, %v2453
    %v2455 = vpop.f32.mrb[0].mxu0
    %v2456 = vadd.f32 %v2383, %v2455
    %v2457 = vpop.f32.mrb[0].mxu0
    %v2458 = vadd.f32 %v2385, %v2457
    %v2459 = vpop.f32.mrb[0].mxu0
    %v2460 = vadd.f32 %v2387, %v2459
    %2461 = vmatprep.mubr.bf16.mxu0 %v1547
    %2462 = vmatmul.mubr.bf16.gmra.mrb[0].mxu0 %v1546
    %v2463 = vpop.f32.mrb[0].mxu0
    %v2464 = vadd.f32 %v2391, %v2463
    %v2465 = vpop.f32.mrb[0].mxu0
    %v2466 = vadd.f32 %v2393, %v2465
    %v2467 = vpop.f32.mrb[0].mxu0
    %v2468 = vadd.f32 %v2395, %v2467
    %v2469 = vpop.f32.mrb[0].mxu0
    %v2470 = vadd.f32 %v2397, %v2469
    %2471 = vmatprep.mubr.bf16.mxu0 %v1551
    %2472 = vmatmul.mubr.bf16.gmra.mrb[0].mxu0 %v1550
    %v2473 = vpop.f32.mrb[0].mxu0
    %v2474 = vadd.f32 %v2401, %v2473
    %v2475 = vpop.f32.mrb[0].mxu0
    %v2476 = vadd.f32 %v2403, %v2475
    %v2477 = vpop.f32.mrb[0].mxu0
    %v2478 = vadd.f32 %v2405, %v2477
    %v2479 = vpop.f32.mrb[0].mxu0
    %v2480 = vadd.f32 %v2407, %v2479
    %2481 = vmatprep.mubr.bf16.mxu0 %v1555
    %2482 = vmatmul.mubr.bf16.gmra.mrb[0].mxu0 %v1554
    %v2483 = vpop.f32.mrb[0].mxu0
    %v2484 = vadd.f32 %v2411, %v2483
    %v2485 = vpop.f32.mrb[0].mxu0
    %v2486 = vadd.f32 %v2413, %v2485
    %v2487 = vpop.f32.mrb[0].mxu0
    %v2488 = vadd.f32 %v2415, %v2487
    %v2489 = vpop.f32.mrb[0].mxu0
    %v2490 = vadd.f32 %v2417, %v2489
    %2491 = vdwg.mxu0
    %2492 = vmatprep.subr.bf16.mxu0 %v2093
    %2493 = vmatpush1.bf16.msra.mxu0 %v2092
    %2494 = vmatprep.subr.bf16.mxu0 %v2097
    %2495 = vmatpush1.bf16.msra.mxu0 %v2096
    %2496 = vmatprep.subr.bf16.mxu0 %v2101
    %2497 = vmatpush1.bf16.msra.mxu0 %v2100
    %2498 = vmatprep.subr.bf16.mxu0 %v2105
    %2499 = vmatpush1.bf16.msra.mxu0 %v2104
    %2500 = vmatprep.subr.bf16.mxu0 %v2109
    %2501 = vmatpush1.bf16.msra.mxu0 %v2108
    %2502 = vmatprep.subr.bf16.mxu0 %v2113
    %2503 = vmatpush1.bf16.msra.mxu0 %v2112
    %2504 = vmatprep.subr.bf16.mxu0 %v2117
    %2505 = vmatpush1.bf16.msra.mxu0 %v2116
    %2506 = vmatprep.subr.bf16.mxu0 %v2121
    %2507 = vmatpush1.bf16.msra.mxu0 %v2120
    %2508 = vmatprep.subr.bf16.mxu0 %v2125
    %2509 = vmatpush1.bf16.msra.mxu0 %v2124
    %2510 = vmatprep.subr.bf16.mxu0 %v2129
    %2511 = vmatpush1.bf16.msra.mxu0 %v2128
    %2512 = vmatprep.subr.bf16.mxu0 %v2133
    %2513 = vmatpush1.bf16.msra.mxu0 %v2132
    %2514 = vmatprep.subr.bf16.mxu0 %v2137
    %2515 = vmatpush1.bf16.msra.mxu0 %v2136
    %2516 = vmatprep.subr.bf16.mxu0 %v2141
    %2517 = vmatpush1.bf16.msra.mxu0 %v2140
    %2518 = vmatprep.subr.bf16.mxu0 %v2145
    %2519 = vmatpush1.bf16.msra.mxu0 %v2144
    %2520 = vmatprep.subr.bf16.mxu0 %v2149
    %2521 = vmatpush1.bf16.msra.mxu0 %v2148
    %2522 = vmatprep.subr.bf16.mxu0 %v2153
    %2523 = vmatpush1.bf16.msra.mxu0 %v2152
    %2524 = vmatprep.mubr.bf16.mxu0 %v1541
    %2525 = vmatmul.mubr.bf16.gmra.mrb[0].mxu0 %v1540
    %v2526 = vpop.f32.mrb[0].mxu0
    %v2527 = vadd.f32 %v1697, %v2526
    %v2528 = vpop.f32.mrb[0].mxu0
    %v2529 = vadd.f32 %v1701, %v2528
    %v2530 = vpop.f32.mrb[0].mxu0
    %v2531 = vadd.f32 %v1697, %v2530
    %v2532 = vpop.f32.mrb[0].mxu0
    %v2533 = vadd.f32 %v1701, %v2532
    %2534 = vmatprep.mubr.bf16.mxu0 %v1545
    %2535 = vmatmul.mubr.bf16.gmra.mrb[0].mxu0 %v1544
    %v2536 = vpop.f32.mrb[0].mxu0
    %v2537 = vadd.f32 %v1697, %v2536
    %v2538 = vpop.f32.mrb[0].mxu0
    %v2539 = vadd.f32 %v1701, %v2538
    %v2540 = vpop.f32.mrb[0].mxu0
    %v2541 = vadd.f32 %v1697, %v2540
    %v2542 = vpop.f32.mrb[0].mxu0
    %v2543 = vadd.f32 %v1701, %v2542
    %2544 = vmatprep.mubr.bf16.mxu0 %v1549
    %2545 = vmatmul.mubr.bf16.gmra.mrb[0].mxu0 %v1548
    %v2546 = vpop.f32.mrb[0].mxu0
    %v2547 = vadd.f32 %v1697, %v2546
    %v2548 = vpop.f32.mrb[0].mxu0
    %v2549 = vadd.f32 %v1701, %v2548
    %v2550 = vpop.f32.mrb[0].mxu0
    %v2551 = vadd.f32 %v1697, %v2550
    %v2552 = vpop.f32.mrb[0].mxu0
    %v2553 = vadd.f32 %v1701, %v2552
    %2554 = vmatprep.mubr.bf16.mxu0 %v1553
    %2555 = vmatmul.mubr.bf16.gmra.mrb[0].mxu0 %v1552
    %v2556 = vpop.f32.mrb[0].mxu0
    %v2557 = vadd.f32 %v1697, %v2556
    %v2558 = vpop.f32.mrb[0].mxu0
    %v2559 = vadd.f32 %v1701, %v2558
    %v2560 = vpop.f32.mrb[0].mxu0
    %v2561 = vadd.f32 %v1697, %v2560
    %v2562 = vpop.f32.mrb[0].mxu0
    %v2563 = vadd.f32 %v1701, %v2562
    %2564 = vdwg.mxu0
    %2565 = vmatprep.subr.bf16.mxu0 %v2157
    %2566 = vmatpush1.bf16.msra.mxu0 %v2156
    %2567 = vmatprep.subr.bf16.mxu0 %v2161
    %2568 = vmatpush1.bf16.msra.mxu0 %v2160
    %2569 = vmatprep.subr.bf16.mxu0 %v2165
    %2570 = vmatpush1.bf16.msra.mxu0 %v2164
    %2571 = vmatprep.subr.bf16.mxu0 %v2169
    %2572 = vmatpush1.bf16.msra.mxu0 %v2168
    %2573 = vmatprep.subr.bf16.mxu0 %v2173
    %2574 = vmatpush1.bf16.msra.mxu0 %v2172
    %2575 = vmatprep.subr.bf16.mxu0 %v2177
    %2576 = vmatpush1.bf16.msra.mxu0 %v2176
    %2577 = vmatprep.subr.bf16.mxu0 %v2181
    %2578 = vmatpush1.bf16.msra.mxu0 %v2180
    %2579 = vmatprep.subr.bf16.mxu0 %v2185
    %2580 = vmatpush1.bf16.msra.mxu0 %v2184
    %2581 = vmatprep.subr.bf16.mxu0 %v2189
    %2582 = vmatpush1.bf16.msra.mxu0 %v2188
    %2583 = vmatprep.subr.bf16.mxu0 %v2193
    %2584 = vmatpush1.bf16.msra.mxu0 %v2192
    %2585 = vmatprep.subr.bf16.mxu0 %v2197
    %2586 = vmatpush1.bf16.msra.mxu0 %v2196
    %2587 = vmatprep.subr.bf16.mxu0 %v2201
    %2588 = vmatpush1.bf16.msra.mxu0 %v2200
    %2589 = vmatprep.subr.bf16.mxu0 %v2205
    %2590 = vmatpush1.bf16.msra.mxu0 %v2204
    %2591 = vmatprep.subr.bf16.mxu0 %v2209
    %2592 = vmatpush1.bf16.msra.mxu0 %v2208
    %2593 = vmatprep.subr.bf16.mxu0 %v2213
    %2594 = vmatpush1.bf16.msra.mxu0 %v2212
    %2595 = vmatprep.subr.bf16.mxu0 %v2217
    %2596 = vmatpush1.bf16.msra.mxu0 %v2216
    %2597 = vmatprep.mubr.bf16.mxu0 %v1543
    %2598 = vmatmul.mubr.bf16.gmra.mrb[0].mxu0 %v1542
    %v2599 = vpop.f32.mrb[0].mxu0
    %v2600 = vadd.f32 %v2527, %v2599
    %v2601 = vpop.f32.mrb[0].mxu0
    %v2602 = vadd.f32 %v2529, %v2601
    %v2603 = vpop.f32.mrb[0].mxu0
    %v2604 = vadd.f32 %v2531, %v2603
    %v2605 = vpop.f32.mrb[0].mxu0
    %v2606 = vadd.f32 %v2533, %v2605
    %2607 = vmatprep.mubr.bf16.mxu0 %v1547
    %2608 = vmatmul.mubr.bf16.gmra.mrb[0].mxu0 %v1546
    %v2609 = vpop.f32.mrb[0].mxu0
    %v2610 = vadd.f32 %v2537, %v2609
    %v2611 = vpop.f32.mrb[0].mxu0
    %v2612 = vadd.f32 %v2539, %v2611
    %v2613 = vpop.f32.mrb[0].mxu0
    %v2614 = vadd.f32 %v2541, %v2613
    %v2615 = vpop.f32.mrb[0].mxu0
    %v2616 = vadd.f32 %v2543, %v2615
    %2617 = vmatprep.mubr.bf16.mxu0 %v1551
    %2618 = vmatmul.mubr.bf16.gmra.mrb[0].mxu0 %v1550
    %v2619 = vpop.f32.mrb[0].mxu0
    %v2620 = vadd.f32 %v2547, %v2619
    %v2621 = vpop.f32.mrb[0].mxu0
    %v2622 = vadd.f32 %v2549, %v2621
    %v2623 = vpop.f32.mrb[0].mxu0
    %v2624 = vadd.f32 %v2551, %v2623
    %v2625 = vpop.f32.mrb[0].mxu0
    %v2626 = vadd.f32 %v2553, %v2625
    %2627 = vmatprep.mubr.bf16.mxu0 %v1555
    %2628 = vmatmul.mubr.bf16.gmra.mrb[0].mxu0 %v1554
    %v2629 = vpop.f32.mrb[0].mxu0
    %v2630 = vadd.f32 %v2557, %v2629
    %v2631 = vpop.f32.mrb[0].mxu0
    %v2632 = vadd.f32 %v2559, %v2631
    %v2633 = vpop.f32.mrb[0].mxu0
    %v2634 = vadd.f32 %v2561, %v2633
    %v2635 = vpop.f32.mrb[0].mxu0
    %v2636 = vadd.f32 %v2563, %v2635
    %2637 = vdwg.mxu0
    %v2638 = vmax.f32 %v2454, 0.0
    %v2639 = vmax.f32 %v2456, 0.0
    %v2640 = vmax.f32 %v2600, 0.0
    %v2641 = vmax.f32 %v2602, 0.0
    %v2642 = vmax.f32 %v2458, 0.0
    %v2643 = vmax.f32 %v2460, 0.0
    %v2644 = vmax.f32 %v2604, 0.0
    %v2645 = vmax.f32 %v2606, 0.0
    %v2646 = vmax.f32 %v2464, 0.0
    %v2647 = vmax.f32 %v2466, 0.0
    %v2648 = vmax.f32 %v2610, 0.0
    %v2649 = vmax.f32 %v2612, 0.0
    %v2650 = vmax.f32 %v2468, 0.0
    %v2651 = vmax.f32 %v2470, 0.0
    %v2652 = vmax.f32 %v2614, 0.0
    %v2653 = vmax.f32 %v2616, 0.0
    %v2654 = vmax.f32 %v2474, 0.0
    %v2655 = vmax.f32 %v2476, 0.0
    %v2656 = vmax.f32 %v2620, 0.0
    %v2657 = vmax.f32 %v2622, 0.0
    %v2658 = vmax.f32 %v2478, 0.0
    %v2659 = vmax.f32 %v2480, 0.0
    %v2660 = vmax.f32 %v2624, 0.0
    %v2661 = vmax.f32 %v2626, 0.0
    %v2662 = vmax.f32 %v2484, 0.0
    %v2663 = vmax.f32 %v2486, 0.0
    %v2664 = vmax.f32 %v2630, 0.0
    %v2665 = vmax.f32 %v2632, 0.0
    %v2666 = vmax.f32 %v2488, 0.0
    %v2667 = vmax.f32 %v2490, 0.0
    %v2668 = vmax.f32 %v2634, 0.0
    %v2669 = vmax.f32 %v2636, 0.0
    %v2670 = vpack.c.bf16 %v2642, %v2638
    %v2671 = vpack.c.bf16 %v2643, %v2639
    %v2672 = vpack.c.bf16 %v2644, %v2640
    %v2673 = vpack.c.bf16 %v2645, %v2641
    %v2674 = vpack.c.bf16 %v2650, %v2646
    %v2675 = vpack.c.bf16 %v2651, %v2647
    %v2676 = vpack.c.bf16 %v2652, %v2648
    %v2677 = vpack.c.bf16 %v2653, %v2649
    %v2678 = vpack.c.bf16 %v2658, %v2654
    %v2679 = vpack.c.bf16 %v2659, %v2655
    %v2680 = vpack.c.bf16 %v2660, %v2656
    %v2681 = vpack.c.bf16 %v2661, %v2657
    %v2682 = vpack.c.bf16 %v2666, %v2662
    %v2683 = vpack.c.bf16 %v2667, %v2663
    %v2684 = vpack.c.bf16 %v2668, %v2664
    %v2685 = vpack.c.bf16 %v2669, %v2665
    %v2686 = vld [vmem:[#allocation6] sm:$0xf]
    %v2687 = vld [vmem:[#allocation6 + $0x4] sm:$0xf]
    %v2688 = vld [vmem:[#allocation6 + $0x8] sm:$0xf]
    %v2689 = vld [vmem:[#allocation6 + $0xc] sm:$0xf]
    %v2690 = vld [vmem:[#allocation6 + $0x10] sm:$0xf]
    %v2691 = vld [vmem:[#allocation6 + $0x14] sm:$0xf]
    %v2692 = vld [vmem:[#allocation6 + $0x18] sm:$0xf]
    %v2693 = vld [vmem:[#allocation6 + $0x1c] sm:$0xf]
    %v2694 = vld [vmem:[#allocation6 + $0x20] sm:$0xf]
    %v2695 = vld [vmem:[#allocation6 + $0x24] sm:$0xf]
    %v2696 = vld [vmem:[#allocation6 + $0x28] sm:$0xf]
    %v2697 = vld [vmem:[#allocation6 + $0x2c] sm:$0xf]
    %v2698 = vld [vmem:[#allocation6 + $0x30] sm:$0xf]
    %v2699 = vld [vmem:[#allocation6 + $0x34] sm:$0xf]
    %v2700 = vld [vmem:[#allocation6 + $0x38] sm:$0xf]
    %v2701 = vld [vmem:[#allocation6 + $0x3c] sm:$0xf]
    %v2702 = vld [vmem:[#allocation6 + $0x40] sm:$0xf]
    %v2703 = vld [vmem:[#allocation6 + $0x44] sm:$0xf]
    %v2704 = vld [vmem:[#allocation6 + $0x48] sm:$0xf]
    %v2705 = vld [vmem:[#allocation6 + $0x4c] sm:$0xf]
    %v2706 = vld [vmem:[#allocation6 + $0x50] sm:$0xf]
    %v2707 = vld [vmem:[#allocation6 + $0x54] sm:$0xf]
    %v2708 = vld [vmem:[#allocation6 + $0x58] sm:$0xf]
    %v2709 = vld [vmem:[#allocation6 + $0x5c] sm:$0xf]
    %v2710 = vld [vmem:[#allocation6 + $0x60] sm:$0xf]
    %v2711 = vld [vmem:[#allocation6 + $0x64] sm:$0xf]
    %v2712 = vld [vmem:[#allocation6 + $0x68] sm:$0xf]
    %v2713 = vld [vmem:[#allocation6 + $0x6c] sm:$0xf]
    %v2714 = vld [vmem:[#allocation6 + $0x70] sm:$0xf]
    %v2715 = vld [vmem:[#allocation6 + $0x74] sm:$0xf]
    %v2716 = vld [vmem:[#allocation6 + $0x78] sm:$0xf]
    %v2717 = vld [vmem:[#allocation6 + $0x7c] sm:$0xf]
    %v2718 = vld [vmem:[#allocation6 + $0x80] sm:$0xf]
    %v2719 = vld [vmem:[#allocation6 + $0x84] sm:$0xf]
    %v2720 = vld [vmem:[#allocation6 + $0x88] sm:$0xf]
    %v2721 = vld [vmem:[#allocation6 + $0x8c] sm:$0xf]
    %v2722 = vld [vmem:[#allocation6 + $0x90] sm:$0xf]
    %v2723 = vld [vmem:[#allocation6 + $0x94] sm:$0xf]
    %v2724 = vld [vmem:[#allocation6 + $0x98] sm:$0xf]
    %v2725 = vld [vmem:[#allocation6 + $0x9c] sm:$0xf]
    %v2726 = vld [vmem:[#allocation6 + $0xa0] sm:$0xf]
    %v2727 = vld [vmem:[#allocation6 + $0xa4] sm:$0xf]
    %v2728 = vld [vmem:[#allocation6 + $0xa8] sm:$0xf]
    %v2729 = vld [vmem:[#allocation6 + $0xac] sm:$0xf]
    %v2730 = vld [vmem:[#allocation6 + $0xb0] sm:$0xf]
    %v2731 = vld [vmem:[#allocation6 + $0xb4] sm:$0xf]
    %v2732 = vld [vmem:[#allocation6 + $0xb8] sm:$0xf]
    %v2733 = vld [vmem:[#allocation6 + $0xbc] sm:$0xf]
    %v2734 = vld [vmem:[#allocation6 + $0xc0] sm:$0xf]
    %v2735 = vld [vmem:[#allocation6 + $0xc4] sm:$0xf]
    %v2736 = vld [vmem:[#allocation6 + $0xc8] sm:$0xf]
    %v2737 = vld [vmem:[#allocation6 + $0xcc] sm:$0xf]
    %v2738 = vld [vmem:[#allocation6 + $0xd0] sm:$0xf]
    %v2739 = vld [vmem:[#allocation6 + $0xd4] sm:$0xf]
    %v2740 = vld [vmem:[#allocation6 + $0xd8] sm:$0xf]
    %v2741 = vld [vmem:[#allocation6 + $0xdc] sm:$0xf]
    %v2742 = vld [vmem:[#allocation6 + $0xe0] sm:$0xf]
    %v2743 = vld [vmem:[#allocation6 + $0xe4] sm:$0xf]
    %v2744 = vld [vmem:[#allocation6 + $0xe8] sm:$0xf]
    %v2745 = vld [vmem:[#allocation6 + $0xec] sm:$0xf]
    %v2746 = vld [vmem:[#allocation6 + $0xf0] sm:$0xf]
    %v2747 = vld [vmem:[#allocation6 + $0xf4] sm:$0xf]
    %v2748 = vld [vmem:[#allocation6 + $0xf8] sm:$0xf]
    %v2749 = vld [vmem:[#allocation6 + $0xfc] sm:$0xf]
    %v2750 = vld [vmem:[%s8] sm:$0x1]
    %v2752 = vlaneseq
    %v2753 = vshrl.u32 %v2752, 7
    %v2754 = vsub.s32 0, %v2753
    %v2755 = vrot.slane %v2750, %v2754
    %v2821 = vunpack.c.l.b16 %v2686
    %v2822 = vunpack.c.l.b16 %v2687
    %v2823 = vunpack.c.l.b16 %v2688
    %v2824 = vunpack.c.l.b16 %v2689
    %v2825 = vunpack.c.l.b16 %v2690
    %v2826 = vunpack.c.l.b16 %v2691
    %v2827 = vunpack.c.l.b16 %v2692
    %v2828 = vunpack.c.l.b16 %v2693
    %v2829 = vunpack.c.l.b16 %v2694
    %v2830 = vunpack.c.l.b16 %v2695
    %v2831 = vunpack.c.l.b16 %v2696
    %v2832 = vunpack.c.l.b16 %v2697
    %v2833 = vunpack.c.l.b16 %v2698
    %v2834 = vunpack.c.l.b16 %v2699
    %v2835 = vunpack.c.l.b16 %v2700
    %v2836 = vunpack.c.l.b16 %v2701
    %v2837 = vunpack.c.l.b16 %v2702
    %v2838 = vunpack.c.l.b16 %v2703
    %v2839 = vunpack.c.l.b16 %v2704
    %v2840 = vunpack.c.l.b16 %v2705
    %v2841 = vunpack.c.l.b16 %v2706
    %v2842 = vunpack.c.l.b16 %v2707
    %v2843 = vunpack.c.l.b16 %v2708
    %v2844 = vunpack.c.l.b16 %v2709
    %v2845 = vunpack.c.l.b16 %v2710
    %v2846 = vunpack.c.l.b16 %v2711
    %v2847 = vunpack.c.l.b16 %v2712
    %v2848 = vunpack.c.l.b16 %v2713
    %v2849 = vunpack.c.l.b16 %v2714
    %v2850 = vunpack.c.l.b16 %v2715
    %v2851 = vunpack.c.l.b16 %v2716
    %v2852 = vunpack.c.l.b16 %v2717
    %v2853 = vunpack.c.l.b16 %v2718
    %v2854 = vunpack.c.l.b16 %v2719
    %v2855 = vunpack.c.l.b16 %v2720
    %v2856 = vunpack.c.l.b16 %v2721
    %v2857 = vunpack.c.l.b16 %v2722
    %v2858 = vunpack.c.l.b16 %v2723
    %v2859 = vunpack.c.l.b16 %v2724
    %v2860 = vunpack.c.l.b16 %v2725
    %v2861 = vunpack.c.l.b16 %v2726
    %v2862 = vunpack.c.l.b16 %v2727
    %v2863 = vunpack.c.l.b16 %v2728
    %v2864 = vunpack.c.l.b16 %v2729
    %v2865 = vunpack.c.l.b16 %v2730
    %v2866 = vunpack.c.l.b16 %v2731
    %v2867 = vunpack.c.l.b16 %v2732
    %v2868 = vunpack.c.l.b16 %v2733
    %v2869 = vunpack.c.l.b16 %v2734
    %v2870 = vunpack.c.l.b16 %v2735
    %v2871 = vunpack.c.l.b16 %v2736
    %v2872 = vunpack.c.l.b16 %v2737
    %v2873 = vunpack.c.l.b16 %v2738
    %v2874 = vunpack.c.l.b16 %v2739
    %v2875 = vunpack.c.l.b16 %v2740
    %v2876 = vunpack.c.l.b16 %v2741
    %v2877 = vunpack.c.l.b16 %v2742
    %v2878 = vunpack.c.l.b16 %v2743
    %v2879 = vunpack.c.l.b16 %v2744
    %v2880 = vunpack.c.l.b16 %v2745
    %v2881 = vunpack.c.l.b16 %v2746
    %v2882 = vunpack.c.l.b16 %v2747
    %v2883 = vunpack.c.l.b16 %v2748
    %v2884 = vunpack.c.l.b16 %v2749
    %v2885 = vpack.c.b16 %v2822, %v2821
    %v2886 = vpack.c.b16 %v2824, %v2823
    %v2887 = vpack.c.b16 %v2826, %v2825
    %v2888 = vpack.c.b16 %v2828, %v2827
    %v2889 = vpack.c.b16 %v2830, %v2829
    %v2890 = vpack.c.b16 %v2832, %v2831
    %v2891 = vpack.c.b16 %v2834, %v2833
    %v2892 = vpack.c.b16 %v2836, %v2835
    %v2893 = vpack.c.b16 %v2838, %v2837
    %v2894 = vpack.c.b16 %v2840, %v2839
    %v2895 = vpack.c.b16 %v2842, %v2841
    %v2896 = vpack.c.b16 %v2844, %v2843
    %v2897 = vpack.c.b16 %v2846, %v2845
    %v2898 = vpack.c.b16 %v2848, %v2847
    %v2899 = vpack.c.b16 %v2850, %v2849
    %v2900 = vpack.c.b16 %v2852, %v2851
    %v2901 = vpack.c.b16 %v2854, %v2853
    %v2902 = vpack.c.b16 %v2856, %v2855
    %v2903 = vpack.c.b16 %v2858, %v2857
    %v2904 = vpack.c.b16 %v2860, %v2859
    %v2905 = vpack.c.b16 %v2862, %v2861
    %v2906 = vpack.c.b16 %v2864, %v2863
    %v2907 = vpack.c.b16 %v2866, %v2865
    %v2908 = vpack.c.b16 %v2868, %v2867
    %v2909 = vpack.c.b16 %v2870, %v2869
    %v2910 = vpack.c.b16 %v2872, %v2871
    %v2911 = vpack.c.b16 %v2874, %v2873
    %v2912 = vpack.c.b16 %v2876, %v2875
    %v2913 = vpack.c.b16 %v2878, %v2877
    %v2914 = vpack.c.b16 %v2880, %v2879
    %v2915 = vpack.c.b16 %v2882, %v2881
    %v2916 = vpack.c.b16 %v2884, %v2883
    %2949 = vmatprep.subr.bf16.mxu0 0
    %2950 = vmatpush1.bf16.msra.mxu0 %v2885
    %2951 = vmatprep.subr.bf16.mxu0 0
    %2952 = vmatpush1.bf16.msra.mxu0 %v2886
    %2953 = vmatprep.subr.bf16.mxu0 0
    %2954 = vmatpush1.bf16.msra.mxu0 %v2887
    %2955 = vmatprep.subr.bf16.mxu0 0
    %2956 = vmatpush1.bf16.msra.mxu0 %v2888
    %2957 = vmatprep.subr.bf16.mxu0 0
    %2958 = vmatpush1.bf16.msra.mxu0 %v2889
    %2959 = vmatprep.subr.bf16.mxu0 0
    %2960 = vmatpush1.bf16.msra.mxu0 %v2890
    %2961 = vmatprep.subr.bf16.mxu0 0
    %2962 = vmatpush1.bf16.msra.mxu0 %v2891
    %2963 = vmatprep.subr.bf16.mxu0 0
    %2964 = vmatpush1.bf16.msra.mxu0 %v2892
    %2965 = vmatprep.subr.bf16.mxu0 0
    %2966 = vmatpush1.bf16.msra.mxu0 %v2893
    %2967 = vmatprep.subr.bf16.mxu0 0
    %2968 = vmatpush1.bf16.msra.mxu0 %v2894
    %2969 = vmatprep.subr.bf16.mxu0 0
    %2970 = vmatpush1.bf16.msra.mxu0 %v2895
    %2971 = vmatprep.subr.bf16.mxu0 0
    %2972 = vmatpush1.bf16.msra.mxu0 %v2896
    %2973 = vmatprep.subr.bf16.mxu0 0
    %2974 = vmatpush1.bf16.msra.mxu0 %v2897
    %2975 = vmatprep.subr.bf16.mxu0 0
    %2976 = vmatpush1.bf16.msra.mxu0 %v2898
    %2977 = vmatprep.subr.bf16.mxu0 0
    %2978 = vmatpush1.bf16.msra.mxu0 %v2899
    %2979 = vmatprep.subr.bf16.mxu0 0
    %2980 = vmatpush1.bf16.msra.mxu0 %v2900
    %2981 = vmatprep.mubr.bf16.mxu0 %v2671
    %2982 = vmatmul.mubr.bf16.gmra.mrb[0].mxu0 %v2670
    %v2983 = vpop.f32.mrb[0].mxu0
    %v2984 = vadd.f32 %v2755, %v2983
    %v2985 = vpop.f32.mrb[0].mxu0
    %v2986 = vpop.f32.mrb[0].mxu0
    %v2987 = vadd.f32 %v2755, %v2986
    %v2988 = vpop.f32.mrb[0].mxu0
    %2989 = vmatprep.mubr.bf16.mxu0 %v2675
    %2990 = vmatmul.mubr.bf16.gmra.mrb[0].mxu0 %v2674
    %v2991 = vpop.f32.mrb[0].mxu0
    %v2992 = vadd.f32 %v2755, %v2991
    %v2993 = vpop.f32.mrb[0].mxu0
    %v2994 = vpop.f32.mrb[0].mxu0
    %v2995 = vadd.f32 %v2755, %v2994
    %v2996 = vpop.f32.mrb[0].mxu0
    %2997 = vmatprep.mubr.bf16.mxu0 %v2679
    %2998 = vmatmul.mubr.bf16.gmra.mrb[0].mxu0 %v2678
    %v2999 = vpop.f32.mrb[0].mxu0
    %v3000 = vadd.f32 %v2755, %v2999
    %v3001 = vpop.f32.mrb[0].mxu0
    %v3002 = vpop.f32.mrb[0].mxu0
    %v3003 = vadd.f32 %v2755, %v3002
    %v3004 = vpop.f32.mrb[0].mxu0
    %3005 = vmatprep.mubr.bf16.mxu0 %v2683
    %3006 = vmatmul.mubr.bf16.gmra.mrb[0].mxu0 %v2682
    %v3007 = vpop.f32.mrb[0].mxu0
    %v3008 = vadd.f32 %v2755, %v3007
    %v3009 = vpop.f32.mrb[0].mxu0
    %v3010 = vpop.f32.mrb[0].mxu0
    %v3011 = vadd.f32 %v2755, %v3010
    %v3012 = vpop.f32.mrb[0].mxu0
    %3013 = vdwg.mxu0
    %3014 = vmatprep.subr.bf16.mxu0 0
    %3015 = vmatpush1.bf16.msra.mxu0 %v2901
    %3016 = vmatprep.subr.bf16.mxu0 0
    %3017 = vmatpush1.bf16.msra.mxu0 %v2902
    %3018 = vmatprep.subr.bf16.mxu0 0
    %3019 = vmatpush1.bf16.msra.mxu0 %v2903
    %3020 = vmatprep.subr.bf16.mxu0 0
    %3021 = vmatpush1.bf16.msra.mxu0 %v2904
    %3022 = vmatprep.subr.bf16.mxu0 0
    %3023 = vmatpush1.bf16.msra.mxu0 %v2905
    %3024 = vmatprep.subr.bf16.mxu0 0
    %3025 = vmatpush1.bf16.msra.mxu0 %v2906
    %3026 = vmatprep.subr.bf16.mxu0 0
    %3027 = vmatpush1.bf16.msra.mxu0 %v2907
    %3028 = vmatprep.subr.bf16.mxu0 0
    %3029 = vmatpush1.bf16.msra.mxu0 %v2908
    %3030 = vmatprep.subr.bf16.mxu0 0
    %3031 = vmatpush1.bf16.msra.mxu0 %v2909
    %3032 = vmatprep.subr.bf16.mxu0 0
    %3033 = vmatpush1.bf16.msra.mxu0 %v2910
    %3034 = vmatprep.subr.bf16.mxu0 0
    %3035 = vmatpush1.bf16.msra.mxu0 %v2911
    %3036 = vmatprep.subr.bf16.mxu0 0
    %3037 = vmatpush1.bf16.msra.mxu0 %v2912
    %3038 = vmatprep.subr.bf16.mxu0 0
    %3039 = vmatpush1.bf16.msra.mxu0 %v2913
    %3040 = vmatprep.subr.bf16.mxu0 0
    %3041 = vmatpush1.bf16.msra.mxu0 %v2914
    %3042 = vmatprep.subr.bf16.mxu0 0
    %3043 = vmatpush1.bf16.msra.mxu0 %v2915
    %3044 = vmatprep.subr.bf16.mxu0 0
    %3045 = vmatpush1.bf16.msra.mxu0 %v2916
    %3046 = vmatprep.mubr.bf16.mxu0 %v2673
    %3047 = vmatmul.mubr.bf16.gmra.mrb[0].mxu0 %v2672
    %v3048 = vpop.f32.mrb[0].mxu0
    %v3049 = vadd.f32 %v2984, %v3048
    %v3050 = vpop.f32.mrb[0].mxu0
    %v3051 = vpop.f32.mrb[0].mxu0
    %v3052 = vadd.f32 %v2987, %v3051
    %v3053 = vpop.f32.mrb[0].mxu0
    %3054 = vmatprep.mubr.bf16.mxu0 %v2677
    %3055 = vmatmul.mubr.bf16.gmra.mrb[0].mxu0 %v2676
    %v3056 = vpop.f32.mrb[0].mxu0
    %v3057 = vadd.f32 %v2992, %v3056
    %v3058 = vpop.f32.mrb[0].mxu0
    %v3059 = vpop.f32.mrb[0].mxu0
    %v3060 = vadd.f32 %v2995, %v3059
    %v3061 = vpop.f32.mrb[0].mxu0
    %3062 = vmatprep.mubr.bf16.mxu0 %v2681
    %3063 = vmatmul.mubr.bf16.gmra.mrb[0].mxu0 %v2680
    %v3064 = vpop.f32.mrb[0].mxu0
    %v3065 = vadd.f32 %v3000, %v3064
    %v3066 = vpop.f32.mrb[0].mxu0
    %v3067 = vpop.f32.mrb[0].mxu0
    %v3068 = vadd.f32 %v3003, %v3067
    %v3069 = vpop.f32.mrb[0].mxu0
    %3070 = vmatprep.mubr.bf16.mxu0 %v2685
    %3071 = vmatmul.mubr.bf16.gmra.mrb[0].mxu0 %v2684
    %v3072 = vpop.f32.mrb[0].mxu0
    %v3073 = vadd.f32 %v3008, %v3072
    %v3074 = vpop.f32.mrb[0].mxu0
    %v3075 = vpop.f32.mrb[0].mxu0
    %v3076 = vadd.f32 %v3011, %v3075
    %v3077 = vpop.f32.mrb[0].mxu0
    %3078 = vdwg.mxu0
    %v3079 = vpack.c.bf16 %v3052, %v3049
    %v3080 = vpack.c.bf16 %v3060, %v3057
    %v3081 = vpack.c.bf16 %v3068, %v3065
    %v3082 = vpack.c.bf16 %v3076, %v3073
    %v3087 = vunpack.c.l.b16 %v3079
    %v3088 = vunpack.c.h.b16 %v3079
    %v3089 = vunpack.c.l.b16 %v3080
    %v3090 = vunpack.c.h.b16 %v3080
    %v3091 = vunpack.c.l.b16 %v3081
    %v3092 = vunpack.c.h.b16 %v3081
    %v3093 = vunpack.c.l.b16 %v3082
    %v3094 = vunpack.c.h.b16 %v3082
    %v3095 = vpack.c.b16 %v3087, %v3087
    %v3096 = vpack.c.b16 %v3088, %v3088
    %v3097 = vpack.c.b16 %v3089, %v3089
    %v3098 = vpack.c.b16 %v3090, %v3090
    %v3099 = vpack.c.b16 %v3091, %v3091
    %v3100 = vpack.c.b16 %v3092, %v3092
    %v3101 = vpack.c.b16 %v3093, %v3093
    %v3102 = vpack.c.b16 %v3094, %v3094
    %3111 = vst [vmem:[%s9] sm:$0xf] %v3095
    %3112 = vst [vmem:[%s9 + $0x4] sm:$0xf] %v3096
    %3113 = vst [vmem:[%s9 + $0x8] sm:$0xf] %v3097
    %3114 = vst [vmem:[%s9 + $0xc] sm:$0xf] %v3098
    %3115 = vst [vmem:[%s9 + $0x10] sm:$0xf] %v3099
    %3116 = vst [vmem:[%s9 + $0x14] sm:$0xf] %v3100
    %3117 = vst [vmem:[%s9 + $0x18] sm:$0xf] %v3101
    %3118 = vst [vmem:[%s9 + $0x1c] sm:$0xf] %v3102
    // Predicated region
    $region50: #{generator_forward.1} parent=1 // pred_check
      _
    $region51: #{generator_forward.1} parent=1 // pred_check_branch
      %3120 = sbr.rel (0) target = $region53
    $region52: #{generator_forward.1} parent=1 // pred_region
      _
    $region53: #{generator_forward.1} parent=1 // pred_fallthru
      _
    // Predicated region
    $region54: #{generator_forward.1} parent=1 // pred_check
      _
    $region55: #{generator_forward.1} parent=1 // pred_check_branch
      %3122 = sbr.rel (0) target = $region57
    $region56: #{generator_forward.1} parent=1 // pred_region
      _
    $region57: #{generator_forward.1} parent=1 // pred_fallthru
      _
    %3123 = vsyncpa [#allocation3], 1
    %3124 = vsyncpa [#allocation5], 1

</llo_original>
